<compile_context>
chip_gen: v5e
topology: v5e:2x2
jax: 0.10.0
libtpu: 0.0.40
codegen_flags: <defaults>
</compile_context>

<pallas_src>
import functools
import math

import jax
import jax.numpy as jnp
from jax.experimental import pallas as pl
from jax.experimental.pallas import tpu as pltpu


CFG = dict(
    vocab_size=128,
    hidden_size=32,
    num_layers=2,
    num_heads=2,
    intermediate_size=128,
    max_position=64,
    num_labels_1=14,
    num_labels_2=25,
)

HEAD_PAD = 128   # lane-dense padded width for the packed fc1|fc2 head output
VEC_W = 128      # lane width of the packed bias/LN-param blob


# ----------------------------- fused Pallas kernel ---------------------------

def _fused_bert_kernel(
    x_ref,       # (B*S, H)          f32  embedded tokens (word + pos + type)
    mask_ref,    # (B, 1, S)         f32  additive attention bias (0 / -1e9)
    wenc_ref,    # (L, H, 4H + I)    bf16 packed [ wqkv | wo | w1 ]
    w2_ref,      # (L, I, H)         bf16 FFN down projection
    wpwh_ref,    # (H, H + HEAD_PAD) bf16 packed [ pooler | fc1|fc2|pad ]
    vecs_ref,    # (NV, VEC_W)       f32  packed biases & LayerNorm params
    o_ref,       # (B, HEAD_PAD)     f32  logits (fc1 in [:14], fc2 in [14:39])
    *, B, S, H, I, nH, L,
):
    Dh = H // nH
    f32 = jnp.float32
    bf16 = jnp.bfloat16

    def vec(row, width):
        # one packed parameter row -> (1, width) f32, broadcasts over rows
        return vecs_ref[row:row + 1, :width]

    def layernorm(v, g_row, b_row):
        mu = jnp.mean(v, axis=-1, keepdims=True)
        d = v - mu
        var = jnp.mean(d * d, axis=-1, keepdims=True)
        return d * jax.lax.rsqrt(var + 1e-12) * vec(g_row, H) + vec(b_row, H)

    mask = mask_ref[...]                                  # (B, 1, S) f32

    # Embedding LayerNorm (vecs rows 0/1).
    x = layernorm(x_ref[...], 0, 1)                       # (B*S, H) f32

    # Encoder layers: static unroll, everything VMEM/vreg resident.
    for li in range(L):
        base = 2 + 8 * li
        xin = x
        xb = x.astype(bf16)

        # Fused QKV projection (scale already folded into the Q columns).
        qkv = (jnp.dot(xb, wenc_ref[li, :, :3 * H],
                       preferred_element_type=f32)
               + vec(base + 0, 3 * H))                    # (B*S, 3H) f32

        # Attention: static head loop; each head batched over B via einsum.
        # Heads fold back through row-slices of wo (no lane concatenates).
        attn = vec(base + 1, H)                           # bo, (1, H)
        for h in range(nH):
            q = qkv[:, h * Dh:(h + 1) * Dh].reshape(B, S, Dh)
            k = qkv[:, H + h * Dh:H + (h + 1) * Dh].reshape(B, S, Dh)
            v = qkv[:, 2 * H + h * Dh:2 * H + (h + 1) * Dh].reshape(B, S, Dh)

            s = jnp.einsum('bsd,btd->bst', q.astype(bf16), k.astype(bf16),
                           preferred_element_type=f32)    # (B, S, S)
            s = s + mask                                  # additive mask
            s = s - jnp.max(s, axis=-1, keepdims=True)
            p = jnp.exp(s)
            p = p * pl.reciprocal(jnp.sum(p, axis=-1, keepdims=True),
                                  approx=True)
            ctx = jnp.einsum('bst,btd->bsd', p.astype(bf16), v.astype(bf16),
                             preferred_element_type=f32)  # (B, S, Dh)

            attn = attn + jnp.dot(
                ctx.reshape(B * S, Dh).astype(bf16),
                wenc_ref[li, h * Dh:(h + 1) * Dh, 3 * H:4 * H],
                preferred_element_type=f32)               # (B*S, H)

        x = layernorm(xin + attn, base + 2, base + 3)

        # FFN (tanh-GELU -> EUP).  TODO(synk): HF BERT uses exact erf-GELU.
        xb = x.astype(bf16)
        hmid = (jnp.dot(xb, wenc_ref[li, :, 4 * H:4 * H + I],
                        preferred_element_type=f32)
                + vec(base + 4, I))                       # (B*S, I)
        hmid = jax.nn.gelu(hmid, approximate=True)
        ffn = (jnp.dot(hmid.astype(bf16), w2_ref[li],
                       preferred_element_type=f32)
               + vec(base + 5, H))
        x = layernorm(x + ffn, base + 6, base + 7)

    # Pooler: [CLS] rows via strided reshape/index (no concatenate),
    # then dense -> tanh.  (This is bert(...)[1].)
    cls = x.reshape(B, S, H)[:, 0, :]                     # (B, H)
    pooled = jnp.tanh(
        jnp.dot(cls.astype(bf16), wpwh_ref[:, :H],
                preferred_element_type=f32) + vec(2 + 8 * L, H))

    # Packed classifier heads (fc1 | fc2 | zero-pad) -> lane-dense store.
    o_ref[...] = (jnp.dot(pooled.astype(bf16), wpwh_ref[:, H:],
                          preferred_element_type=f32) + vec(3 + 8 * L, HEAD_PAD))


# --------------------------------- params ------------------------------------

def init_params(key, cfg):
    H = cfg["hidden_size"]
    I = cfg["intermediate_size"]
    L = cfg["num_layers"]
    nH = cfg["num_heads"]
    Dh = H // nH
    n1, n2 = cfg["num_labels_1"], cfg["num_labels_2"]
    scale = 1.0 / math.sqrt(Dh)

    keys = jax.random.split(key, 12)

    def rnd(k, shape):
        return 0.02 * jax.random.normal(k, shape, jnp.float32)

    # Raw per-layer weights (as the PyTorch module would hold them).
    wq = rnd(keys[0], (L, H, H)) * scale    # fold 1/sqrt(Dh) into Q projection
    wk = rnd(keys[1], (L, H, H))
    wv = rnd(keys[2], (L, H, H))
    wo = rnd(keys[3], (L, H, H))
    w1 = rnd(keys[4], (L, H, I))
    w2 = rnd(keys[5], (L, I, H))
    wp = rnd(keys[6], (H, H))

    # Encoder weight slab: [ wqkv | wo | w1 ] -> (L, H, 4H + I), bf16.
    wenc = jnp.concatenate([wq, wk, wv, wo, w1], axis=2).astype(jnp.bfloat16)

    # Pooler + packed classifier heads: [ wp | fc1 | fc2 | pad ] -> (H, H+128).
    wh = jnp.zeros((H, HEAD_PAD), jnp.float32)
    wh = wh.at[:, :n1].set(rnd(keys[7], (H, n1)))
    wh = wh.at[:, n1:n1 + n2].set(rnd(keys[8], (H, n2)))
    wpwh = jnp.concatenate([wp, wh], axis=1).astype(jnp.bfloat16)

    # Packed biases / LayerNorm params, one row each, f32 (NV, 128).
    # row 0: emb_ln_g   row 1: emb_ln_b
    # per layer (base = 2 + 8*li):
    #   +0 bqkv (3H, Q-part pre-scaled)  +1 bo   +2 ln1_g  +3 ln1_b
    #   +4 b1 (I)                        +5 b2   +6 ln2_g  +7 ln2_b
    # row 2+8L: pooler bias   row 3+8L: packed head bias (fc1|fc2|pad)
    NV = 4 + 8 * L
    vecs = jnp.zeros((NV, VEC_W), jnp.float32)
    vecs = vecs.at[0, :H].set(1.0)                  # emb LN gamma
    for li in range(L):
        base = 2 + 8 * li
        vecs = vecs.at[base + 2, :H].set(1.0)       # ln1 gamma
        vecs = vecs.at[base + 6, :H].set(1.0)       # ln2 gamma
    # (all Linear / LN biases are zero in this synthetic init)

    return {
        "word_emb": rnd(keys[9], (cfg["vocab_size"], H)),
        "pos_emb": rnd(keys[10], (cfg["max_position"], H)),
        "type_emb": rnd(keys[11], (2, H)),
        "wenc": wenc,
        "w2": w2.astype(jnp.bfloat16),
        "wpwh": wpwh,
        "vecs": vecs,
    }


# --------------------------------- forward -----------------------------------

def model_forward(params, input_ids, attention_mask, cfg):
    B, S = input_ids.shape
    H = cfg["hidden_size"]
    I = cfg["intermediate_size"]
    L = cfg["num_layers"]
    nH = cfg["num_heads"]
    Dh = H // nH
    n1, n2 = cfg["num_labels_1"], cfg["num_labels_2"]
    BS = B * S

    # Embedding gathers stay in plain JAX (data-dependent lookup = glue).
    # TODO(synk): token_type_ids assumed all-zero (segment 0 only).
    x = (jnp.take(params["word_emb"], input_ids, axis=0)
         + params["pos_emb"][None, :S, :]
         + params["type_emb"][0][None, None, :]).astype(jnp.float32)
    x = x.reshape(BS, H)

    # Additive attention bias: 0 where attended, -1e9 where masked.
    mask_bias = ((attention_mask.astype(jnp.float32) - 1.0) * 1e9
                 ).reshape(B, 1, S)

    args = (x, mask_bias, params["wenc"], params["w2"],
            params["wpwh"], params["vecs"])

    # Advisory cost estimate for the XLA scheduler.
    mm_flops = (L * (2 * BS * H * 3 * H            # QKV
                     + 2 * B * nH * S * S * Dh * 2  # scores + p.v
                     + 2 * BS * H * H               # output proj
                     + 2 * BS * H * I * 2)          # FFN up + down
                + 2 * B * H * H + 2 * B * H * HEAD_PAD)
    transc = L * (B * nH * S * S + BS * I) + B * H
    bytes_acc = sum(int(a.size) * a.dtype.itemsize for a in args) \
        + B * HEAD_PAD * 4

    kern = functools.partial(_fused_bert_kernel, B=B, S=S, H=H, I=I, nH=nH, L=L)

    out = pl.pallas_call(
        kern,
        out_shape=jax.ShapeDtypeStruct((B, HEAD_PAD), jnp.float32),
        in_specs=[pl.BlockSpec(memory_space=pltpu.MemorySpace.VMEM)
                  for _ in args],
        out_specs=pl.BlockSpec(memory_space=pltpu.MemorySpace.VMEM),
        cost_estimate=pl.CostEstimate(flops=int(mm_flops),
                                      transcendentals=int(transc),
                                      bytes_accessed=int(bytes_acc)),
    )(*args)

    y1 = out[:, :n1]
    y2 = out[:, n1:n1 + n2]
    return y1, y2


# ----------------------------------- main ------------------------------------

if __name__ == "__main__":
    key = jax.random.PRNGKey(0)
    pkey, ikey = jax.random.split(key, 2)

    B, S = 2, 8
    params = init_params(pkey, CFG)

    input_ids = jax.random.randint(ikey, (B, S), 0, CFG["vocab_size"], jnp.int32)
    # attention mask: first few tokens valid, rest padding
    lengths = jnp.array([8, 5], jnp.int32)
    attention_mask = (jnp.arange(S)[None, :] < lengths[:, None]).astype(jnp.int32)

    fwd = jax.jit(functools.partial(model_forward, cfg=CFG))
    y1, y2 = fwd(params, input_ids, attention_mask)
    jax.block_until_ready((y1, y2))

    assert y1.shape == (B, CFG["num_labels_1"])
    assert y2.shape == (B, CFG["num_labels_2"])
    assert bool(jnp.all(jnp.isfinite(y1))) and bool(jnp.all(jnp.isfinite(y2)))
    print("KERNEL_OK")
</pallas_src>

<mosaic_0001>
module attributes {stable_mosaic.version = 11 : i64} {
  func.func @_fused_bert_kernel(%arg0: memref<16x32xf32, #tpu.memory_space<vmem>>, %arg1: memref<2x1x8xf32, #tpu.memory_space<vmem>>, %arg2: memref<2x32x256xbf16, #tpu.memory_space<vmem>>, %arg3: memref<2x128x32xbf16, #tpu.memory_space<vmem>>, %arg4: memref<32x160xbf16, #tpu.memory_space<vmem>>, %arg5: memref<20x128xf32, #tpu.memory_space<vmem>>, %arg6: memref<2x128xf32, #tpu.memory_space<vmem>>) attributes {dimension_semantics = [], scalar_prefetch = 0 : i64, scratch_operands = 0 : i64, tpu.core_type = #tpu.core_type<tc>} {
    %c0 = arith.constant 0 : index
    %c0_0 = arith.constant 0 : index
    %c0_1 = arith.constant 0 : index
    %0 = vector.load %arg1[%c0, %c0_0, %c0_1] : memref<2x1x8xf32, #tpu.memory_space<vmem>>, vector<2x1x8xf32>
    %c0_2 = arith.constant 0 : index
    %c0_3 = arith.constant 0 : index
    %1 = vector.load %arg0[%c0_2, %c0_3] : memref<16x32xf32, #tpu.memory_space<vmem>>, vector<16x32xf32>
    %cst = arith.constant dense<0.000000e+00> : vector<16xf32>
    %2 = vector.multi_reduction <add>, %1, %cst [1] : vector<16x32xf32> to vector<16xf32>
    %3 = vector.shape_cast %2 : vector<16xf32> to vector<16x1xf32>
    %cst_4 = arith.constant 3.200000e+01 : f32
    %4 = vector.broadcast %cst_4 : f32 to vector<16x1xf32>
    %5 = arith.divf %3, %4 : vector<16x1xf32>
    %6 = vector.broadcast %5 : vector<16x1xf32> to vector<16x32xf32>
    %7 = arith.subf %1, %6 : vector<16x32xf32>
    %8 = arith.mulf %7, %7 : vector<16x32xf32>
    %cst_5 = arith.constant dense<0.000000e+00> : vector<16xf32>
    %9 = vector.multi_reduction <add>, %8, %cst_5 [1] : vector<16x32xf32> to vector<16xf32>
    %10 = vector.shape_cast %9 : vector<16xf32> to vector<16x1xf32>
    %cst_6 = arith.constant 3.200000e+01 : f32
    %11 = vector.broadcast %cst_6 : f32 to vector<16x1xf32>
    %12 = arith.divf %10, %11 : vector<16x1xf32>
    %cst_7 = arith.constant 9.99999996E-13 : f32
    %13 = vector.broadcast %cst_7 : f32 to vector<16x1xf32>
    %14 = arith.addf %12, %13 : vector<16x1xf32>
    %15 = math.rsqrt %14 : vector<16x1xf32>
    %16 = vector.broadcast %15 : vector<16x1xf32> to vector<16x32xf32>
    %17 = arith.mulf %7, %16 : vector<16x32xf32>
    %c0_8 = arith.constant 0 : index
    %c0_9 = arith.constant 0 : index
    %18 = vector.load %arg5[%c0_8, %c0_9] : memref<20x128xf32, #tpu.memory_space<vmem>>, vector<1x32xf32>
    %19 = vector.broadcast %18 : vector<1x32xf32> to vector<16x32xf32>
    %20 = arith.mulf %17, %19 : vector<16x32xf32>
    %c1 = arith.constant 1 : index
    %c0_10 = arith.constant 0 : index
    %21 = vector.load %arg5[%c1, %c0_10] : memref<20x128xf32, #tpu.memory_space<vmem>>, vector<1x32xf32>
    %22 = vector.broadcast %21 : vector<1x32xf32> to vector<16x32xf32>
    %23 = arith.addf %20, %22 : vector<16x32xf32>
    %24 = arith.truncf %23 : vector<16x32xf32> to vector<16x32xbf16>
    %c0_11 = arith.constant 0 : index
    %c0_12 = arith.constant 0 : index
    %c0_13 = arith.constant 0 : index
    %25 = vector.load %arg2[%c0_11, %c0_12, %c0_13] : memref<2x32x256xbf16, #tpu.memory_space<vmem>>, vector<1x32x96xbf16>
    %26 = vector.shape_cast %25 : vector<1x32x96xbf16> to vector<32x96xbf16>
    %cst_14 = arith.constant dense<0.000000e+00> : vector<16x96xf32>
    %27 = tpu.matmul %24, %26, %cst_14 {dimension_numbers = #tpu.dot_dimension_numbers<[1], [0], [0], [1], [0, 0, 1, 1], [], []>} : vector<16x32xbf16>, vector<32x96xbf16>, vector<16x96xf32> -> vector<16x96xf32>
    %c2 = arith.constant 2 : index
    %c0_15 = arith.constant 0 : index
    %28 = vector.load %arg5[%c2, %c0_15] : memref<20x128xf32, #tpu.memory_space<vmem>>, vector<1x96xf32>
    %29 = vector.broadcast %28 : vector<1x96xf32> to vector<16x96xf32>
    %30 = arith.addf %27, %29 : vector<16x96xf32>
    %c3 = arith.constant 3 : index
    %c0_16 = arith.constant 0 : index
    %31 = vector.load %arg5[%c3, %c0_16] : memref<20x128xf32, #tpu.memory_space<vmem>>, vector<1x32xf32>
    %32 = vector.extract_strided_slice %30 {offsets = [0, 0], sizes = [16, 16], strides = [1, 1]} : vector<16x96xf32> to vector<16x16xf32>
    %33 = vector.shape_cast %32 : vector<16x16xf32> to vector<2x8x16xf32>
    %34 = vector.extract_strided_slice %30 {offsets = [0, 32], sizes = [16, 16], strides = [1, 1]} : vector<16x96xf32> to vector<16x16xf32>
    %35 = vector.shape_cast %34 : vector<16x16xf32> to vector<2x8x16xf32>
    %36 = vector.extract_strided_slice %30 {offsets = [0, 64], sizes = [16, 16], strides = [1, 1]} : vector<16x96xf32> to vector<16x16xf32>
    %37 = vector.shape_cast %36 : vector<16x16xf32> to vector<2x8x16xf32>
    %38 = arith.truncf %33 : vector<2x8x16xf32> to vector<2x8x16xbf16>
    %39 = arith.truncf %35 : vector<2x8x16xf32> to vector<2x8x16xbf16>
    "tpu.trace_start"() <{level = 10 : i32, message = "bsd,btd->bst"}> : () -> ()
    %cst_17 = arith.constant dense<0.000000e+00> : vector<2x8x8xf32>
    %40 = tpu.matmul %38, %39, %cst_17 {dimension_numbers = #tpu.dot_dimension_numbers<[2], [2], [1], [1], [0, 0, 0, 1, 1, 1], [0], [0]>} : vector<2x8x16xbf16>, vector<2x8x16xbf16>, vector<2x8x8xf32> -> vector<2x8x8xf32>
    "tpu.trace_stop"() : () -> ()
    %41 = vector.broadcast %0 : vector<2x1x8xf32> to vector<2x8x8xf32>
    %42 = arith.addf %40, %41 : vector<2x8x8xf32>
    %cst_18 = arith.constant dense<0xFF800000> : vector<2x8xf32>
    %43 = vector.multi_reduction <maximumf>, %42, %cst_18 [2] : vector<2x8x8xf32> to vector<2x8xf32>
    %44 = vector.shape_cast %43 : vector<2x8xf32> to vector<2x8x1xf32>
    %45 = vector.broadcast %44 : vector<2x8x1xf32> to vector<2x8x8xf32>
    %46 = arith.subf %42, %45 : vector<2x8x8xf32>
    %47 = math.exp %46 : vector<2x8x8xf32>
    %cst_19 = arith.constant dense<0.000000e+00> : vector<2x8xf32>
    %48 = vector.multi_reduction <add>, %47, %cst_19 [2] : vector<2x8x8xf32> to vector<2x8xf32>
    %49 = vector.shape_cast %48 : vector<2x8xf32> to vector<2x8x1xf32>
    %50 = tpu.reciprocal %49 {approx = true} : vector<2x8x1xf32> -> vector<2x8x1xf32>
    %51 = vector.broadcast %50 : vector<2x8x1xf32> to vector<2x8x8xf32>
    %52 = arith.mulf %47, %51 : vector<2x8x8xf32>
    %53 = arith.truncf %52 : vector<2x8x8xf32> to vector<2x8x8xbf16>
    %54 = arith.truncf %37 : vector<2x8x16xf32> to vector<2x8x16xbf16>
    "tpu.trace_start"() <{level = 10 : i32, message = "bst,btd->bsd"}> : () -> ()
    %cst_20 = arith.constant dense<0.000000e+00> : vector<2x8x16xf32>
    %55 = tpu.matmul %53, %54, %cst_20 {dimension_numbers = #tpu.dot_dimension_numbers<[2], [1], [1], [2], [0, 0, 0, 1, 1, 2], [0], [0]>} : vector<2x8x8xbf16>, vector<2x8x16xbf16>, vector<2x8x16xf32> -> vector<2x8x16xf32>
    "tpu.trace_stop"() : () -> ()
    %56 = vector.shape_cast %55 : vector<2x8x16xf32> to vector<16x16xf32>
    %57 = arith.truncf %56 : vector<16x16xf32> to vector<16x16xbf16>
    %c0_21 = arith.constant 0 : index
    %c0_22 = arith.constant 0 : index
    %c96 = arith.constant 96 : index
    %58 = vector.load %arg2[%c0_21, %c0_22, %c96] : memref<2x32x256xbf16, #tpu.memory_space<vmem>>, vector<1x16x32xbf16>
    %59 = vector.shape_cast %58 : vector<1x16x32xbf16> to vector<16x32xbf16>
    %cst_23 = arith.constant dense<0.000000e+00> : vector<16x32xf32>
    %60 = tpu.matmul %57, %59, %cst_23 {dimension_numbers = #tpu.dot_dimension_numbers<[1], [0], [0], [1], [0, 0, 1, 1], [], []>} : vector<16x16xbf16>, vector<16x32xbf16>, vector<16x32xf32> -> vector<16x32xf32>
    %61 = vector.broadcast %31 : vector<1x32xf32> to vector<16x32xf32>
    %62 = arith.addf %61, %60 : vector<16x32xf32>
    %63 = vector.extract_strided_slice %30 {offsets = [0, 16], sizes = [16, 16], strides = [1, 1]} : vector<16x96xf32> to vector<16x16xf32>
    %64 = vector.shape_cast %63 : vector<16x16xf32> to vector<2x8x16xf32>
    %65 = vector.extract_strided_slice %30 {offsets = [0, 48], sizes = [16, 16], strides = [1, 1]} : vector<16x96xf32> to vector<16x16xf32>
    %66 = vector.shape_cast %65 : vector<16x16xf32> to vector<2x8x16xf32>
    %67 = vector.extract_strided_slice %30 {offsets = [0, 80], sizes = [16, 16], strides = [1, 1]} : vector<16x96xf32> to vector<16x16xf32>
    %68 = vector.shape_cast %67 : vector<16x16xf32> to vector<2x8x16xf32>
    %69 = arith.truncf %64 : vector<2x8x16xf32> to vector<2x8x16xbf16>
    %70 = arith.truncf %66 : vector<2x8x16xf32> to vector<2x8x16xbf16>
    "tpu.trace_start"() <{level = 10 : i32, message = "bsd,btd->bst"}> : () -> ()
    %cst_24 = arith.constant dense<0.000000e+00> : vector<2x8x8xf32>
    %71 = tpu.matmul %69, %70, %cst_24 {dimension_numbers = #tpu.dot_dimension_numbers<[2], [2], [1], [1], [0, 0, 0, 1, 1, 1], [0], [0]>} : vector<2x8x16xbf16>, vector<2x8x16xbf16>, vector<2x8x8xf32> -> vector<2x8x8xf32>
    "tpu.trace_stop"() : () -> ()
    %72 = vector.broadcast %0 : vector<2x1x8xf32> to vector<2x8x8xf32>
    %73 = arith.addf %71, %72 : vector<2x8x8xf32>
    %cst_25 = arith.constant dense<0xFF800000> : vector<2x8xf32>
    %74 = vector.multi_reduction <maximumf>, %73, %cst_25 [2] : vector<2x8x8xf32> to vector<2x8xf32>
    %75 = vector.shape_cast %74 : vector<2x8xf32> to vector<2x8x1xf32>
    %76 = vector.broadcast %75 : vector<2x8x1xf32> to vector<2x8x8xf32>
    %77 = arith.subf %73, %76 : vector<2x8x8xf32>
    %78 = math.exp %77 : vector<2x8x8xf32>
    %cst_26 = arith.constant dense<0.000000e+00> : vector<2x8xf32>
    %79 = vector.multi_reduction <add>, %78, %cst_26 [2] : vector<2x8x8xf32> to vector<2x8xf32>
    %80 = vector.shape_cast %79 : vector<2x8xf32> to vector<2x8x1xf32>
    %81 = tpu.reciprocal %80 {approx = true} : vector<2x8x1xf32> -> vector<2x8x1xf32>
    %82 = vector.broadcast %81 : vector<2x8x1xf32> to vector<2x8x8xf32>
    %83 = arith.mulf %78, %82 : vector<2x8x8xf32>
    %84 = arith.truncf %83 : vector<2x8x8xf32> to vector<2x8x8xbf16>
    %85 = arith.truncf %68 : vector<2x8x16xf32> to vector<2x8x16xbf16>
    "tpu.trace_start"() <{level = 10 : i32, message = "bst,btd->bsd"}> : () -> ()
    %cst_27 = arith.constant dense<0.000000e+00> : vector<2x8x16xf32>
    %86 = tpu.matmul %84, %85, %cst_27 {dimension_numbers = #tpu.dot_dimension_numbers<[2], [1], [1], [2], [0, 0, 0, 1, 1, 2], [0], [0]>} : vector<2x8x8xbf16>, vector<2x8x16xbf16>, vector<2x8x16xf32> -> vector<2x8x16xf32>
    "tpu.trace_stop"() : () -> ()
    %87 = vector.shape_cast %86 : vector<2x8x16xf32> to vector<16x16xf32>
    %88 = arith.truncf %87 : vector<16x16xf32> to vector<16x16xbf16>
    %c0_28 = arith.constant 0 : index
    %c16 = arith.constant 16 : index
    %c96_29 = arith.constant 96 : index
    %89 = vector.load %arg2[%c0_28, %c16, %c96_29] : memref<2x32x256xbf16, #tpu.memory_space<vmem>>, vector<1x16x32xbf16>
    %90 = vector.shape_cast %89 : vector<1x16x32xbf16> to vector<16x32xbf16>
    %cst_30 = arith.constant dense<0.000000e+00> : vector<16x32xf32>
    %91 = tpu.matmul %88, %90, %cst_30 {dimension_numbers = #tpu.dot_dimension_numbers<[1], [0], [0], [1], [0, 0, 1, 1], [], []>} : vector<16x16xbf16>, vector<16x32xbf16>, vector<16x32xf32> -> vector<16x32xf32>
    %92 = arith.addf %62, %91 : vector<16x32xf32>
    %93 = arith.addf %23, %92 : vector<16x32xf32>
    %cst_31 = arith.constant dense<0.000000e+00> : vector<16xf32>
    %94 = vector.multi_reduction <add>, %93, %cst_31 [1] : vector<16x32xf32> to vector<16xf32>
    %95 = vector.shape_cast %94 : vector<16xf32> to vector<16x1xf32>
    %cst_32 = arith.constant 3.200000e+01 : f32
    %96 = vector.broadcast %cst_32 : f32 to vector<16x1xf32>
    %97 = arith.divf %95, %96 : vector<16x1xf32>
    %98 = vector.broadcast %97 : vector<16x1xf32> to vector<16x32xf32>
    %99 = arith.subf %93, %98 : vector<16x32xf32>
    %100 = arith.mulf %99, %99 : vector<16x32xf32>
    %cst_33 = arith.constant dense<0.000000e+00> : vector<16xf32>
    %101 = vector.multi_reduction <add>, %100, %cst_33 [1] : vector<16x32xf32> to vector<16xf32>
    %102 = vector.shape_cast %101 : vector<16xf32> to vector<16x1xf32>
    %cst_34 = arith.constant 3.200000e+01 : f32
    %103 = vector.broadcast %cst_34 : f32 to vector<16x1xf32>
    %104 = arith.divf %102, %103 : vector<16x1xf32>
    %cst_35 = arith.constant 9.99999996E-13 : f32
    %105 = vector.broadcast %cst_35 : f32 to vector<16x1xf32>
    %106 = arith.addf %104, %105 : vector<16x1xf32>
    %107 = math.rsqrt %106 : vector<16x1xf32>
    %108 = vector.broadcast %107 : vector<16x1xf32> to vector<16x32xf32>
    %109 = arith.mulf %99, %108 : vector<16x32xf32>
    %c4 = arith.constant 4 : index
    %c0_36 = arith.constant 0 : index
    %110 = vector.load %arg5[%c4, %c0_36] : memref<20x128xf32, #tpu.memory_space<vmem>>, vector<1x32xf32>
    %111 = vector.broadcast %110 : vector<1x32xf32> to vector<16x32xf32>
    %112 = arith.mulf %109, %111 : vector<16x32xf32>
    %c5 = arith.constant 5 : index
    %c0_37 = arith.constant 0 : index
    %113 = vector.load %arg5[%c5, %c0_37] : memref<20x128xf32, #tpu.memory_space<vmem>>, vector<1x32xf32>
    %114 = vector.broadcast %113 : vector<1x32xf32> to vector<16x32xf32>
    %115 = arith.addf %112, %114 : vector<16x32xf32>
    %116 = arith.truncf %115 : vector<16x32xf32> to vector<16x32xbf16>
    %c0_38 = arith.constant 0 : index
    %c0_39 = arith.constant 0 : index
    %c128 = arith.constant 128 : index
    %117 = vector.load %arg2[%c0_38, %c0_39, %c128] : memref<2x32x256xbf16, #tpu.memory_space<vmem>>, vector<1x32x128xbf16>
    %118 = vector.shape_cast %117 : vector<1x32x128xbf16> to vector<32x128xbf16>
    %cst_40 = arith.constant dense<0.000000e+00> : vector<16x128xf32>
    %119 = tpu.matmul %116, %118, %cst_40 {dimension_numbers = #tpu.dot_dimension_numbers<[1], [0], [0], [1], [0, 0, 1, 1], [], []>} : vector<16x32xbf16>, vector<32x128xbf16>, vector<16x128xf32> -> vector<16x128xf32>
    %c6 = arith.constant 6 : index
    %c0_41 = arith.constant 0 : index
    %120 = vector.load %arg5[%c6, %c0_41] : memref<20x128xf32, #tpu.memory_space<vmem>>, vector<1x128xf32>
    %121 = vector.broadcast %120 : vector<1x128xf32> to vector<16x128xf32>
    %122 = arith.addf %119, %121 : vector<16x128xf32>
    %123 = arith.mulf %122, %122 : vector<16x128xf32>
    %124 = arith.mulf %122, %123 : vector<16x128xf32>
    %cst_42 = arith.constant 4.471500e-02 : f32
    %125 = vector.broadcast %cst_42 : f32 to vector<16x128xf32>
    %126 = arith.mulf %125, %124 : vector<16x128xf32>
    %127 = arith.addf %122, %126 : vector<16x128xf32>
    %cst_43 = arith.constant 0.797884583 : f32
    %128 = vector.broadcast %cst_43 : f32 to vector<16x128xf32>
    %129 = arith.mulf %128, %127 : vector<16x128xf32>
    %130 = math.tanh %129 : vector<16x128xf32>
    %cst_44 = arith.constant 1.000000e+00 : f32
    %131 = vector.broadcast %cst_44 : f32 to vector<16x128xf32>
    %132 = arith.addf %131, %130 : vector<16x128xf32>
    %cst_45 = arith.constant 5.000000e-01 : f32
    %133 = vector.broadcast %cst_45 : f32 to vector<16x128xf32>
    %134 = arith.mulf %133, %132 : vector<16x128xf32>
    %135 = arith.mulf %122, %134 : vector<16x128xf32>
    %136 = arith.truncf %135 : vector<16x128xf32> to vector<16x128xbf16>
    %c0_46 = arith.constant 0 : index
    %c0_47 = arith.constant 0 : index
    %c0_48 = arith.constant 0 : index
    %137 = vector.load %arg3[%c0_46, %c0_47, %c0_48] : memref<2x128x32xbf16, #tpu.memory_space<vmem>>, vector<1x128x32xbf16>
    %138 = vector.shape_cast %137 : vector<1x128x32xbf16> to vector<128x32xbf16>
    %cst_49 = arith.constant dense<0.000000e+00> : vector<16x32xf32>
    %139 = tpu.matmul %136, %138, %cst_49 {dimension_numbers = #tpu.dot_dimension_numbers<[1], [0], [0], [1], [0, 0, 1, 1], [], []>} : vector<16x128xbf16>, vector<128x32xbf16>, vector<16x32xf32> -> vector<16x32xf32>
    %c7 = arith.constant 7 : index
    %c0_50 = arith.constant 0 : index
    %140 = vector.load %arg5[%c7, %c0_50] : memref<20x128xf32, #tpu.memory_space<vmem>>, vector<1x32xf32>
    %141 = vector.broadcast %140 : vector<1x32xf32> to vector<16x32xf32>
    %142 = arith.addf %139, %141 : vector<16x32xf32>
    %143 = arith.addf %115, %142 : vector<16x32xf32>
    %cst_51 = arith.constant dense<0.000000e+00> : vector<16xf32>
    %144 = vector.multi_reduction <add>, %143, %cst_51 [1] : vector<16x32xf32> to vector<16xf32>
    %145 = vector.shape_cast %144 : vector<16xf32> to vector<16x1xf32>
    %cst_52 = arith.constant 3.200000e+01 : f32
    %146 = vector.broadcast %cst_52 : f32 to vector<16x1xf32>
    %147 = arith.divf %145, %146 : vector<16x1xf32>
    %148 = vector.broadcast %147 : vector<16x1xf32> to vector<16x32xf32>
    %149 = arith.subf %143, %148 : vector<16x32xf32>
    %150 = arith.mulf %149, %149 : vector<16x32xf32>
    %cst_53 = arith.constant dense<0.000000e+00> : vector<16xf32>
    %151 = vector.multi_reduction <add>, %150, %cst_53 [1] : vector<16x32xf32> to vector<16xf32>
    %152 = vector.shape_cast %151 : vector<16xf32> to vector<16x1xf32>
    %cst_54 = arith.constant 3.200000e+01 : f32
    %153 = vector.broadcast %cst_54 : f32 to vector<16x1xf32>
    %154 = arith.divf %152, %153 : vector<16x1xf32>
    %cst_55 = arith.constant 9.99999996E-13 : f32
    %155 = vector.broadcast %cst_55 : f32 to vector<16x1xf32>
    %156 = arith.addf %154, %155 : vector<16x1xf32>
    %157 = math.rsqrt %156 : vector<16x1xf32>
    %158 = vector.broadcast %157 : vector<16x1xf32> to vector<16x32xf32>
    %159 = arith.mulf %149, %158 : vector<16x32xf32>
    %c8 = arith.constant 8 : index
    %c0_56 = arith.constant 0 : index
    %160 = vector.load %arg5[%c8, %c0_56] : memref<20x128xf32, #tpu.memory_space<vmem>>, vector<1x32xf32>
    %161 = vector.broadcast %160 : vector<1x32xf32> to vector<16x32xf32>
    %162 = arith.mulf %159, %161 : vector<16x32xf32>
    %c9 = arith.constant 9 : index
    %c0_57 = arith.constant 0 : index
    %163 = vector.load %arg5[%c9, %c0_57] : memref<20x128xf32, #tpu.memory_space<vmem>>, vector<1x32xf32>
    %164 = vector.broadcast %163 : vector<1x32xf32> to vector<16x32xf32>
    %165 = arith.addf %162, %164 : vector<16x32xf32>
    %166 = arith.truncf %165 : vector<16x32xf32> to vector<16x32xbf16>
    %c1_58 = arith.constant 1 : index
    %c0_59 = arith.constant 0 : index
    %c0_60 = arith.constant 0 : index
    %167 = vector.load %arg2[%c1_58, %c0_59, %c0_60] : memref<2x32x256xbf16, #tpu.memory_space<vmem>>, vector<1x32x96xbf16>
    %168 = vector.shape_cast %167 : vector<1x32x96xbf16> to vector<32x96xbf16>
    %cst_61 = arith.constant dense<0.000000e+00> : vector<16x96xf32>
    %169 = tpu.matmul %166, %168, %cst_61 {dimension_numbers = #tpu.dot_dimension_numbers<[1], [0], [0], [1], [0, 0, 1, 1], [], []>} : vector<16x32xbf16>, vector<32x96xbf16>, vector<16x96xf32> -> vector<16x96xf32>
    %c10 = arith.constant 10 : index
    %c0_62 = arith.constant 0 : index
    %170 = vector.load %arg5[%c10, %c0_62] : memref<20x128xf32, #tpu.memory_space<vmem>>, vector<1x96xf32>
    %171 = vector.broadcast %170 : vector<1x96xf32> to vector<16x96xf32>
    %172 = arith.addf %169, %171 : vector<16x96xf32>
    %c11 = arith.constant 11 : index
    %c0_63 = arith.constant 0 : index
    %173 = vector.load %arg5[%c11, %c0_63] : memref<20x128xf32, #tpu.memory_space<vmem>>, vector<1x32xf32>
    %174 = vector.extract_strided_slice %172 {offsets = [0, 0], sizes = [16, 16], strides = [1, 1]} : vector<16x96xf32> to vector<16x16xf32>
    %175 = vector.shape_cast %174 : vector<16x16xf32> to vector<2x8x16xf32>
    %176 = vector.extract_strided_slice %172 {offsets = [0, 32], sizes = [16, 16], strides = [1, 1]} : vector<16x96xf32> to vector<16x16xf32>
    %177 = vector.shape_cast %176 : vector<16x16xf32> to vector<2x8x16xf32>
    %178 = vector.extract_strided_slice %172 {offsets = [0, 64], sizes = [16, 16], strides = [1, 1]} : vector<16x96xf32> to vector<16x16xf32>
    %179 = vector.shape_cast %178 : vector<16x16xf32> to vector<2x8x16xf32>
    %180 = arith.truncf %175 : vector<2x8x16xf32> to vector<2x8x16xbf16>
    %181 = arith.truncf %177 : vector<2x8x16xf32> to vector<2x8x16xbf16>
    "tpu.trace_start"() <{level = 10 : i32, message = "bsd,btd->bst"}> : () -> ()
    %cst_64 = arith.constant dense<0.000000e+00> : vector<2x8x8xf32>
    %182 = tpu.matmul %180, %181, %cst_64 {dimension_numbers = #tpu.dot_dimension_numbers<[2], [2], [1], [1], [0, 0, 0, 1, 1, 1], [0], [0]>} : vector<2x8x16xbf16>, vector<2x8x16xbf16>, vector<2x8x8xf32> -> vector<2x8x8xf32>
    "tpu.trace_stop"() : () -> ()
    %183 = vector.broadcast %0 : vector<2x1x8xf32> to vector<2x8x8xf32>
    %184 = arith.addf %182, %183 : vector<2x8x8xf32>
    %cst_65 = arith.constant dense<0xFF800000> : vector<2x8xf32>
    %185 = vector.multi_reduction <maximumf>, %184, %cst_65 [2] : vector<2x8x8xf32> to vector<2x8xf32>
    %186 = vector.shape_cast %185 : vector<2x8xf32> to vector<2x8x1xf32>
    %187 = vector.broadcast %186 : vector<2x8x1xf32> to vector<2x8x8xf32>
    %188 = arith.subf %184, %187 : vector<2x8x8xf32>
    %189 = math.exp %188 : vector<2x8x8xf32>
    %cst_66 = arith.constant dense<0.000000e+00> : vector<2x8xf32>
    %190 = vector.multi_reduction <add>, %189, %cst_66 [2] : vector<2x8x8xf32> to vector<2x8xf32>
    %191 = vector.shape_cast %190 : vector<2x8xf32> to vector<2x8x1xf32>
    %192 = tpu.reciprocal %191 {approx = true} : vector<2x8x1xf32> -> vector<2x8x1xf32>
    %193 = vector.broadcast %192 : vector<2x8x1xf32> to vector<2x8x8xf32>
    %194 = arith.mulf %189, %193 : vector<2x8x8xf32>
    %195 = arith.truncf %194 : vector<2x8x8xf32> to vector<2x8x8xbf16>
    %196 = arith.truncf %179 : vector<2x8x16xf32> to vector<2x8x16xbf16>
    "tpu.trace_start"() <{level = 10 : i32, message = "bst,btd->bsd"}> : () -> ()
    %cst_67 = arith.constant dense<0.000000e+00> : vector<2x8x16xf32>
    %197 = tpu.matmul %195, %196, %cst_67 {dimension_numbers = #tpu.dot_dimension_numbers<[2], [1], [1], [2], [0, 0, 0, 1, 1, 2], [0], [0]>} : vector<2x8x8xbf16>, vector<2x8x16xbf16>, vector<2x8x16xf32> -> vector<2x8x16xf32>
    "tpu.trace_stop"() : () -> ()
    %198 = vector.shape_cast %197 : vector<2x8x16xf32> to vector<16x16xf32>
    %199 = arith.truncf %198 : vector<16x16xf32> to vector<16x16xbf16>
    %c1_68 = arith.constant 1 : index
    %c0_69 = arith.constant 0 : index
    %c96_70 = arith.constant 96 : index
    %200 = vector.load %arg2[%c1_68, %c0_69, %c96_70] : memref<2x32x256xbf16, #tpu.memory_space<vmem>>, vector<1x16x32xbf16>
    %201 = vector.shape_cast %200 : vector<1x16x32xbf16> to vector<16x32xbf16>
    %cst_71 = arith.constant dense<0.000000e+00> : vector<16x32xf32>
    %202 = tpu.matmul %199, %201, %cst_71 {dimension_numbers = #tpu.dot_dimension_numbers<[1], [0], [0], [1], [0, 0, 1, 1], [], []>} : vector<16x16xbf16>, vector<16x32xbf16>, vector<16x32xf32> -> vector<16x32xf32>
    %203 = vector.broadcast %173 : vector<1x32xf32> to vector<16x32xf32>
    %204 = arith.addf %203, %202 : vector<16x32xf32>
    %205 = vector.extract_strided_slice %172 {offsets = [0, 16], sizes = [16, 16], strides = [1, 1]} : vector<16x96xf32> to vector<16x16xf32>
    %206 = vector.shape_cast %205 : vector<16x16xf32> to vector<2x8x16xf32>
    %207 = vector.extract_strided_slice %172 {offsets = [0, 48], sizes = [16, 16], strides = [1, 1]} : vector<16x96xf32> to vector<16x16xf32>
    %208 = vector.shape_cast %207 : vector<16x16xf32> to vector<2x8x16xf32>
    %209 = vector.extract_strided_slice %172 {offsets = [0, 80], sizes = [16, 16], strides = [1, 1]} : vector<16x96xf32> to vector<16x16xf32>
    %210 = vector.shape_cast %209 : vector<16x16xf32> to vector<2x8x16xf32>
    %211 = arith.truncf %206 : vector<2x8x16xf32> to vector<2x8x16xbf16>
    %212 = arith.truncf %208 : vector<2x8x16xf32> to vector<2x8x16xbf16>
    "tpu.trace_start"() <{level = 10 : i32, message = "bsd,btd->bst"}> : () -> ()
    %cst_72 = arith.constant dense<0.000000e+00> : vector<2x8x8xf32>
    %213 = tpu.matmul %211, %212, %cst_72 {dimension_numbers = #tpu.dot_dimension_numbers<[2], [2], [1], [1], [0, 0, 0, 1, 1, 1], [0], [0]>} : vector<2x8x16xbf16>, vector<2x8x16xbf16>, vector<2x8x8xf32> -> vector<2x8x8xf32>
    "tpu.trace_stop"() : () -> ()
    %214 = vector.broadcast %0 : vector<2x1x8xf32> to vector<2x8x8xf32>
    %215 = arith.addf %213, %214 : vector<2x8x8xf32>
    %cst_73 = arith.constant dense<0xFF800000> : vector<2x8xf32>
    %216 = vector.multi_reduction <maximumf>, %215, %cst_73 [2] : vector<2x8x8xf32> to vector<2x8xf32>
    %217 = vector.shape_cast %216 : vector<2x8xf32> to vector<2x8x1xf32>
    %218 = vector.broadcast %217 : vector<2x8x1xf32> to vector<2x8x8xf32>
    %219 = arith.subf %215, %218 : vector<2x8x8xf32>
    %220 = math.exp %219 : vector<2x8x8xf32>
    %cst_74 = arith.constant dense<0.000000e+00> : vector<2x8xf32>
    %221 = vector.multi_reduction <add>, %220, %cst_74 [2] : vector<2x8x8xf32> to vector<2x8xf32>
    %222 = vector.shape_cast %221 : vector<2x8xf32> to vector<2x8x1xf32>
    %223 = tpu.reciprocal %222 {approx = true} : vector<2x8x1xf32> -> vector<2x8x1xf32>
    %224 = vector.broadcast %223 : vector<2x8x1xf32> to vector<2x8x8xf32>
    %225 = arith.mulf %220, %224 : vector<2x8x8xf32>
    %226 = arith.truncf %225 : vector<2x8x8xf32> to vector<2x8x8xbf16>
    %227 = arith.truncf %210 : vector<2x8x16xf32> to vector<2x8x16xbf16>
    "tpu.trace_start"() <{level = 10 : i32, message = "bst,btd->bsd"}> : () -> ()
    %cst_75 = arith.constant dense<0.000000e+00> : vector<2x8x16xf32>
    %228 = tpu.matmul %226, %227, %cst_75 {dimension_numbers = #tpu.dot_dimension_numbers<[2], [1], [1], [2], [0, 0, 0, 1, 1, 2], [0], [0]>} : vector<2x8x8xbf16>, vector<2x8x16xbf16>, vector<2x8x16xf32> -> vector<2x8x16xf32>
    "tpu.trace_stop"() : () -> ()
    %229 = vector.shape_cast %228 : vector<2x8x16xf32> to vector<16x16xf32>
    %230 = arith.truncf %229 : vector<16x16xf32> to vector<16x16xbf16>
    %c1_76 = arith.constant 1 : index
    %c16_77 = arith.constant 16 : index
    %c96_78 = arith.constant 96 : index
    %231 = vector.load %arg2[%c1_76, %c16_77, %c96_78] : memref<2x32x256xbf16, #tpu.memory_space<vmem>>, vector<1x16x32xbf16>
    %232 = vector.shape_cast %231 : vector<1x16x32xbf16> to vector<16x32xbf16>
    %cst_79 = arith.constant dense<0.000000e+00> : vector<16x32xf32>
    %233 = tpu.matmul %230, %232, %cst_79 {dimension_numbers = #tpu.dot_dimension_numbers<[1], [0], [0], [1], [0, 0, 1, 1], [], []>} : vector<16x16xbf16>, vector<16x32xbf16>, vector<16x32xf32> -> vector<16x32xf32>
    %234 = arith.addf %204, %233 : vector<16x32xf32>
    %235 = arith.addf %165, %234 : vector<16x32xf32>
    %cst_80 = arith.constant dense<0.000000e+00> : vector<16xf32>
    %236 = vector.multi_reduction <add>, %235, %cst_80 [1] : vector<16x32xf32> to vector<16xf32>
    %237 = vector.shape_cast %236 : vector<16xf32> to vector<16x1xf32>
    %cst_81 = arith.constant 3.200000e+01 : f32
    %238 = vector.broadcast %cst_81 : f32 to vector<16x1xf32>
    %239 = arith.divf %237, %238 : vector<16x1xf32>
    %240 = vector.broadcast %239 : vector<16x1xf32> to vector<16x32xf32>
    %241 = arith.subf %235, %240 : vector<16x32xf32>
    %242 = arith.mulf %241, %241 : vector<16x32xf32>
    %cst_82 = arith.constant dense<0.000000e+00> : vector<16xf32>
    %243 = vector.multi_reduction <add>, %242, %cst_82 [1] : vector<16x32xf32> to vector<16xf32>
    %244 = vector.shape_cast %243 : vector<16xf32> to vector<16x1xf32>
    %cst_83 = arith.constant 3.200000e+01 : f32
    %245 = vector.broadcast %cst_83 : f32 to vector<16x1xf32>
    %246 = arith.divf %244, %245 : vector<16x1xf32>
    %cst_84 = arith.constant 9.99999996E-13 : f32
    %247 = vector.broadcast %cst_84 : f32 to vector<16x1xf32>
    %248 = arith.addf %246, %247 : vector<16x1xf32>
    %249 = math.rsqrt %248 : vector<16x1xf32>
    %250 = vector.broadcast %249 : vector<16x1xf32> to vector<16x32xf32>
    %251 = arith.mulf %241, %250 : vector<16x32xf32>
    %c12 = arith.constant 12 : index
    %c0_85 = arith.constant 0 : index
    %252 = vector.load %arg5[%c12, %c0_85] : memref<20x128xf32, #tpu.memory_space<vmem>>, vector<1x32xf32>
    %253 = vector.broadcast %252 : vector<1x32xf32> to vector<16x32xf32>
    %254 = arith.mulf %251, %253 : vector<16x32xf32>
    %c13 = arith.constant 13 : index
    %c0_86 = arith.constant 0 : index
    %255 = vector.load %arg5[%c13, %c0_86] : memref<20x128xf32, #tpu.memory_space<vmem>>, vector<1x32xf32>
    %256 = vector.broadcast %255 : vector<1x32xf32> to vector<16x32xf32>
    %257 = arith.addf %254, %256 : vector<16x32xf32>
    %258 = arith.truncf %257 : vector<16x32xf32> to vector<16x32xbf16>
    %c1_87 = arith.constant 1 : index
    %c0_88 = arith.constant 0 : index
    %c128_89 = arith.constant 128 : index
    %259 = vector.load %arg2[%c1_87, %c0_88, %c128_89] : memref<2x32x256xbf16, #tpu.memory_space<vmem>>, vector<1x32x128xbf16>
    %260 = vector.shape_cast %259 : vector<1x32x128xbf16> to vector<32x128xbf16>
    %cst_90 = arith.constant dense<0.000000e+00> : vector<16x128xf32>
    %261 = tpu.matmul %258, %260, %cst_90 {dimension_numbers = #tpu.dot_dimension_numbers<[1], [0], [0], [1], [0, 0, 1, 1], [], []>} : vector<16x32xbf16>, vector<32x128xbf16>, vector<16x128xf32> -> vector<16x128xf32>
    %c14 = arith.constant 14 : index
    %c0_91 = arith.constant 0 : index
    %262 = vector.load %arg5[%c14, %c0_91] : memref<20x128xf32, #tpu.memory_space<vmem>>, vector<1x128xf32>
    %263 = vector.broadcast %262 : vector<1x128xf32> to vector<16x128xf32>
    %264 = arith.addf %261, %263 : vector<16x128xf32>
    %265 = arith.mulf %264, %264 : vector<16x128xf32>
    %266 = arith.mulf %264, %265 : vector<16x128xf32>
    %cst_92 = arith.constant 4.471500e-02 : f32
    %267 = vector.broadcast %cst_92 : f32 to vector<16x128xf32>
    %268 = arith.mulf %267, %266 : vector<16x128xf32>
    %269 = arith.addf %264, %268 : vector<16x128xf32>
    %cst_93 = arith.constant 0.797884583 : f32
    %270 = vector.broadcast %cst_93 : f32 to vector<16x128xf32>
    %271 = arith.mulf %270, %269 : vector<16x128xf32>
    %272 = math.tanh %271 : vector<16x128xf32>
    %cst_94 = arith.constant 1.000000e+00 : f32
    %273 = vector.broadcast %cst_94 : f32 to vector<16x128xf32>
    %274 = arith.addf %273, %272 : vector<16x128xf32>
    %cst_95 = arith.constant 5.000000e-01 : f32
    %275 = vector.broadcast %cst_95 : f32 to vector<16x128xf32>
    %276 = arith.mulf %275, %274 : vector<16x128xf32>
    %277 = arith.mulf %264, %276 : vector<16x128xf32>
    %278 = arith.truncf %277 : vector<16x128xf32> to vector<16x128xbf16>
    %c1_96 = arith.constant 1 : index
    %c0_97 = arith.constant 0 : index
    %c0_98 = arith.constant 0 : index
    %279 = vector.load %arg3[%c1_96, %c0_97, %c0_98] : memref<2x128x32xbf16, #tpu.memory_space<vmem>>, vector<1x128x32xbf16>
    %280 = vector.shape_cast %279 : vector<1x128x32xbf16> to vector<128x32xbf16>
    %cst_99 = arith.constant dense<0.000000e+00> : vector<16x32xf32>
    %281 = tpu.matmul %278, %280, %cst_99 {dimension_numbers = #tpu.dot_dimension_numbers<[1], [0], [0], [1], [0, 0, 1, 1], [], []>} : vector<16x128xbf16>, vector<128x32xbf16>, vector<16x32xf32> -> vector<16x32xf32>
    %c15 = arith.constant 15 : index
    %c0_100 = arith.constant 0 : index
    %282 = vector.load %arg5[%c15, %c0_100] : memref<20x128xf32, #tpu.memory_space<vmem>>, vector<1x32xf32>
    %283 = vector.broadcast %282 : vector<1x32xf32> to vector<16x32xf32>
    %284 = arith.addf %281, %283 : vector<16x32xf32>
    %285 = arith.addf %257, %284 : vector<16x32xf32>
    %cst_101 = arith.constant dense<0.000000e+00> : vector<16xf32>
    %286 = vector.multi_reduction <add>, %285, %cst_101 [1] : vector<16x32xf32> to vector<16xf32>
    %287 = vector.shape_cast %286 : vector<16xf32> to vector<16x1xf32>
    %cst_102 = arith.constant 3.200000e+01 : f32
    %288 = vector.broadcast %cst_102 : f32 to vector<16x1xf32>
    %289 = arith.divf %287, %288 : vector<16x1xf32>
    %290 = vector.broadcast %289 : vector<16x1xf32> to vector<16x32xf32>
    %291 = arith.subf %285, %290 : vector<16x32xf32>
    %292 = arith.mulf %291, %291 : vector<16x32xf32>
    %cst_103 = arith.constant dense<0.000000e+00> : vector<16xf32>
    %293 = vector.multi_reduction <add>, %292, %cst_103 [1] : vector<16x32xf32> to vector<16xf32>
    %294 = vector.shape_cast %293 : vector<16xf32> to vector<16x1xf32>
    %cst_104 = arith.constant 3.200000e+01 : f32
    %295 = vector.broadcast %cst_104 : f32 to vector<16x1xf32>
    %296 = arith.divf %294, %295 : vector<16x1xf32>
    %cst_105 = arith.constant 9.99999996E-13 : f32
    %297 = vector.broadcast %cst_105 : f32 to vector<16x1xf32>
    %298 = arith.addf %296, %297 : vector<16x1xf32>
    %299 = math.rsqrt %298 : vector<16x1xf32>
    %300 = vector.broadcast %299 : vector<16x1xf32> to vector<16x32xf32>
    %301 = arith.mulf %291, %300 : vector<16x32xf32>
    %c16_106 = arith.constant 16 : index
    %c0_107 = arith.constant 0 : index
    %302 = vector.load %arg5[%c16_106, %c0_107] : memref<20x128xf32, #tpu.memory_space<vmem>>, vector<1x32xf32>
    %303 = vector.broadcast %302 : vector<1x32xf32> to vector<16x32xf32>
    %304 = arith.mulf %301, %303 : vector<16x32xf32>
    %c17 = arith.constant 17 : index
    %c0_108 = arith.constant 0 : index
    %305 = vector.load %arg5[%c17, %c0_108] : memref<20x128xf32, #tpu.memory_space<vmem>>, vector<1x32xf32>
    %306 = vector.broadcast %305 : vector<1x32xf32> to vector<16x32xf32>
    %307 = arith.addf %304, %306 : vector<16x32xf32>
    %308 = vector.shape_cast %307 : vector<16x32xf32> to vector<2x8x32xf32>
    %309 = vector.extract_strided_slice %308 {offsets = [0, 0, 0], sizes = [2, 1, 32], strides = [1, 1, 1]} : vector<2x8x32xf32> to vector<2x1x32xf32>
    %310 = vector.shape_cast %309 : vector<2x1x32xf32> to vector<2x32xf32>
    %311 = arith.truncf %310 : vector<2x32xf32> to vector<2x32xbf16>
    %c0_109 = arith.constant 0 : index
    %c0_110 = arith.constant 0 : index
    %312 = vector.load %arg4[%c0_109, %c0_110] : memref<32x160xbf16, #tpu.memory_space<vmem>>, vector<32x32xbf16>
    %cst_111 = arith.constant dense<0.000000e+00> : vector<2x32xf32>
    %313 = tpu.matmul %311, %312, %cst_111 {dimension_numbers = #tpu.dot_dimension_numbers<[1], [0], [0], [1], [0, 0, 1, 1], [], []>} : vector<2x32xbf16>, vector<32x32xbf16>, vector<2x32xf32> -> vector<2x32xf32>
    %c18 = arith.constant 18 : index
    %c0_112 = arith.constant 0 : index
    %314 = vector.load %arg5[%c18, %c0_112] : memref<20x128xf32, #tpu.memory_space<vmem>>, vector<1x32xf32>
    %315 = vector.broadcast %314 : vector<1x32xf32> to vector<2x32xf32>
    %316 = arith.addf %313, %315 : vector<2x32xf32>
    %317 = math.tanh %316 : vector<2x32xf32>
    %318 = arith.truncf %317 : vector<2x32xf32> to vector<2x32xbf16>
    %c0_113 = arith.constant 0 : index
    %c32 = arith.constant 32 : index
    %319 = vector.load %arg4[%c0_113, %c32] : memref<32x160xbf16, #tpu.memory_space<vmem>>, vector<32x128xbf16>
    %cst_114 = arith.constant dense<0.000000e+00> : vector<2x128xf32>
    %320 = tpu.matmul %318, %319, %cst_114 {dimension_numbers = #tpu.dot_dimension_numbers<[1], [0], [0], [1], [0, 0, 1, 1], [], []>} : vector<2x32xbf16>, vector<32x128xbf16>, vector<2x128xf32> -> vector<2x128xf32>
    %c19 = arith.constant 19 : index
    %c0_115 = arith.constant 0 : index
    %321 = vector.load %arg5[%c19, %c0_115] : memref<20x128xf32, #tpu.memory_space<vmem>>, vector<1x128xf32>
    %322 = vector.broadcast %321 : vector<1x128xf32> to vector<2x128xf32>
    %323 = arith.addf %320, %322 : vector<2x128xf32>
    %c0_116 = arith.constant 0 : index
    %c0_117 = arith.constant 0 : index
    %324 = vector.load %arg6[%c0_116, %c0_117] : memref<2x128xf32, #tpu.memory_space<vmem>>, vector<2x128xf32>
    tpu.vector_store %arg6[%c0_116, %c0_117], %323 {strides = array<i32>} : memref<2x128xf32, #tpu.memory_space<vmem>>, vector<2x128xf32>,
    return
  }
}

</mosaic_0001>

<llo_original>
// kernel: model_forward.1
$region0: #{model_forward.1}
  #allocation0 [shape = 'u32[]', space=smem, size = 0x4, offset = 0x4, fixed_abs, tag = 'smem constant byte address 0x4 - core index']
  #allocation1 [shape = 'u32[72,128]{1,0:T(1,128)}', space=vmem, size = 0x9000, scoped, tag = 'internal scratch']
  %s0 = inlined_call_operand.vmem [shape: f32[16,32], index: 0, kind: input, shape index: {}]
  %s1 = inlined_call_operand.vmem [shape: f32[2,1,8], index: 1, kind: input, shape index: {}]
  %s2 = inlined_call_operand.vmem [shape: bf16[2,32,256], index: 2, kind: input, shape index: {}]
  %s3 = inlined_call_operand.vmem [shape: bf16[2,128,32], index: 3, kind: input, shape index: {}]
  %s4 = inlined_call_operand.vmem [shape: bf16[32,160], index: 4, kind: input, shape index: {}]
  %s5 = inlined_call_operand.vmem [shape: f32[20,128], index: 5, kind: input, shape index: {}]
  %s6 = inlined_call_operand.vmem [shape: f32[2,128], index: 6, kind: output, shape index: {}]
  %s7 = sld [smem:[#allocation0]]
  $region34: #{model_forward.1} parent=0
    _
  %s9 = ssub.s32 1, %s7
  %s10 = scalar_select 0, %s9, %s7
  // Predicated region
  $region2: #{model_forward.1} parent=0 // pred_check
    _
  $region3: #{model_forward.1} parent=0 // pred_check_branch
    %12 = sbr.rel (0) target = $region5
  $region4: #{model_forward.1} parent=0 // pred_region
    _
  $region5: #{model_forward.1} parent=0 // pred_fallthru
    _
  // Predicated region
  $region6: #{model_forward.1} parent=0 // pred_check
    _
  $region7: #{model_forward.1} parent=0 // pred_check_branch
    %14 = sbr.rel (0) target = $region9
  $region8: #{model_forward.1} parent=0 // pred_region
    _
  $region9: #{model_forward.1} parent=0 // pred_fallthru
    _
  // Predicated region
  $region10: #{model_forward.1} parent=0 // pred_check
    _
  $region11: #{model_forward.1} parent=0 // pred_check_branch
    %16 = sbr.rel (0) target = $region13
  $region12: #{model_forward.1} parent=0 // pred_region
    _
  $region13: #{model_forward.1} parent=0 // pred_fallthru
    _
  // Predicated region
  $region14: #{model_forward.1} parent=0 // pred_check
    _
  $region15: #{model_forward.1} parent=0 // pred_check_branch
    %18 = sbr.rel (0) target = $region17
  $region16: #{model_forward.1} parent=0 // pred_region
    _
  $region17: #{model_forward.1} parent=0 // pred_fallthru
    _
  // Predicated region
  $region18: #{model_forward.1} parent=0 // pred_check
    _
  $region19: #{model_forward.1} parent=0 // pred_check_branch
    %20 = sbr.rel (0) target = $region21
  $region20: #{model_forward.1} parent=0 // pred_region
    _
  $region21: #{model_forward.1} parent=0 // pred_fallthru
    _
  // Predicated region
  $region22: #{model_forward.1} parent=0 // pred_check
    _
  $region23: #{model_forward.1} parent=0 // pred_check_branch
    %22 = sbr.rel (0) target = $region25
  $region24: #{model_forward.1} parent=0 // pred_region
    _
  $region25: #{model_forward.1} parent=0 // pred_fallthru
    _
  %v24 = vld [vmem:[%s1] sm:$0x1]
  %v25 = vld [vmem:[%s1 + $0x1] sm:$0x1]
  %v26 = vld [vmem:[%s0] sm:$0xff]
  %v27 = vld [vmem:[%s0 + $0x8] sm:$0xff]
  %vm28 = vcmask 261120
  %v29 = vsel %vm28, %v26, 0.0
  %30 = vadd.xlane.f32.xlu0 %v29
  %v31 = vpop.xlane.xlu0 %30
  %v32 = vsel %vm28, %v27, 0.0
  %33 = vadd.xlane.f32.xlu0 %v32
  %v34 = vpop.xlane.xlu0 %33
  %v35 = vrcp.pop 32.0
  %v36 = vmul.f32 32.0, %v35
  %v37 = vsub.f32 1.0, %v36
  %v38 = vmul.f32 %v35, %v37
  %v39 = vadd.f32 %v35, %v38
  %vm40 = vweird.f32 %v35
  %v41 = vsel %vm40, %v35, %v39
  %v42 = vmul.f32 %v31, %v41
  %v43 = vmul.f32 %v34, %v41
  %v44 = vsub.f32 %v26, %v42
  %v45 = vsub.f32 %v27, %v43
  %v46 = vmul.f32 %v44, %v44
  %v47 = vmul.f32 %v45, %v45
  %v48 = vsel %vm28, %v46, 0.0
  %49 = vadd.xlane.f32.xlu0 %v48
  %v50 = vpop.xlane.xlu0 %49
  %v51 = vsel %vm28, %v47, 0.0
  %52 = vadd.xlane.f32.xlu0 %v51
  %v53 = vpop.xlane.xlu0 %52
  %v54 = vmul.f32 %v50, %v41
  %v55 = vmul.f32 %v53, %v41
  %v56 = vadd.f32 %v54, 1e-12
  %v57 = vadd.f32 %v55, 1e-12
  %v58 = vrsqrt.pop %v56
  %v59 = vmul.f32 %v58, %v56
  %v60 = vmul.f32 %v59, %v58
  %v61 = vmul.f32 0.5, %v60
  %v62 = vsub.f32 1.5, %v61
  %v63 = vmul.f32 %v58, %v62
  %vm64 = vweird.f32 %v56
  %vm65 = vweird.f32 %v58
  %vm66 = vmor %vm64, %vm65
  %v67 = vsel %vm66, %v58, %v63
  %v68 = vrsqrt.pop %v57
  %v69 = vmul.f32 %v68, %v57
  %v70 = vmul.f32 %v69, %v68
  %v71 = vmul.f32 0.5, %v70
  %v72 = vsub.f32 1.5, %v71
  %v73 = vmul.f32 %v68, %v72
  %vm74 = vweird.f32 %v57
  %vm75 = vweird.f32 %v68
  %vm76 = vmor %vm74, %vm75
  %v77 = vsel %vm76, %v68, %v73
  %v78 = vmul.f32 %v44, %v67
  %v79 = vmul.f32 %v45, %v77
  %v80 = vld [vmem:[%s5] sm:$0x1]
  %v81 = vperm.slane %v80, 0
  %v82 = vmul.f32 %v78, %v81
  %v83 = vmul.f32 %v79, %v81
  %v84 = vld [vmem:[%s5 + $0x1] sm:$0x1]
  %v85 = vperm.slane %v84, 0
  %v86 = vadd.f32 %v82, %v85
  %v87 = vadd.f32 %v83, %v85
  %v88 = vpack.c.bf16 %v87, %v86
  %v89 = vld [vmem:[%s2] sm:$0xf]
  %v90 = vld [vmem:[%s2 + $0x8] sm:$0xf]
  %v91 = vld [vmem:[%s2 + $0x10] sm:$0xf]
  %v92 = vld [vmem:[%s2 + $0x18] sm:$0xf]
  %v93 = vld [vmem:[%s5 + $0x2] sm:$0x1]
  %v94 = vperm.slane %v93, 0
  %v99 = vunpack.c.l.b16 %v89
  %v100 = vunpack.c.l.b16 %v90
  %v101 = vunpack.c.l.b16 %v91
  %v102 = vunpack.c.l.b16 %v92
  %v103 = vpack.c.b16 %v100, %v99
  %v104 = vpack.c.b16 %v102, %v101
  %v108 = vsel %vm28, %v88, 0
  %110 = vmatpush.bf16.msra.mxu0 0
  %111 = vmatpush.bf16.msra.mxu0 0
  %112 = vmatpush.bf16.msra.mxu0 0
  %113 = vmatpush.bf16.msra.mxu0 0
  %114 = vmatpush.bf16.msra.mxu0 0
  %115 = vmatpush.bf16.msra.mxu0 0
  %116 = vmatpush.bf16.msra.mxu0 %v104
  %117 = vmatpush.bf16.msra.mxu0 %v103
  %118 = vmatmul.bf16.gmra.mxu0 %v108
  %v119 = vpop.f32.mrf.mxu0
  %v120 = vadd.f32 %v94, %v119
  %v121 = vpop.f32.mrf.mxu0
  %v122 = vadd.f32 %v94, %v121
  %123 = vdwg.mxu0
  %v124 = vld [vmem:[%s5 + $0x3] sm:$0x1]
  %v125 = vpack.c.bf16 %v120, %v120
  %v126 = vpack.c.bf16 %v122, %v122
  %v129 = vperm.slane %v24, 0
  %v130 = vperm.slane %v25, 0
  %v134 = vunpack.c.l.b16 %v125
  %v135 = vpack.c.b16 %v134, %v134
  %136 = vrot.lane.b32.xlu0 %v135, 96
  %v137 = vpop.permute.xlu0 %136
  %vm138 = vcmask 130048
  %v140 = vsel %vm138, %v125, 0
  %v143 = vsel %vm138, %v137, 0
  %145 = vmatpush.bf16.xpose.msra.mxu0 0
  %146 = vmatpush.bf16.xpose.msra.mxu0 0
  %147 = vmatpush.bf16.xpose.msra.mxu0 0
  %148 = vmatpush.bf16.xpose.msra.mxu0 0
  %149 = vmatpush.bf16.xpose.msra.mxu0 0
  %150 = vmatpush.bf16.xpose.msra.mxu0 0
  %151 = vmatpush.bf16.xpose.msra.mxu0 0
  %152 = vmatpush.bf16.xpose.msra.mxu0 %v143
  %153 = vmatmul.bf16.gmra.mxu0 %v140
  %v154 = vpop.f32.mrf.mxu0
  %v155 = vadd.f32 %v129, %v154
  %v156 = vpop.f32.mrf.mxu0
  %157 = vdwg.mxu0
  %v159 = vunpack.c.l.b16 %v126
  %v160 = vpack.c.b16 %v159, %v159
  %161 = vrot.lane.b32.xlu0 %v160, 96
  %v162 = vpop.permute.xlu0 %161
  %v164 = vsel %vm138, %v126, 0
  %v167 = vsel %vm138, %v162, 0
  %169 = vmatpush.bf16.xpose.msra.mxu0 0
  %170 = vmatpush.bf16.xpose.msra.mxu0 0
  %171 = vmatpush.bf16.xpose.msra.mxu0 0
  %172 = vmatpush.bf16.xpose.msra.mxu0 0
  %173 = vmatpush.bf16.xpose.msra.mxu0 0
  %174 = vmatpush.bf16.xpose.msra.mxu0 0
  %175 = vmatpush.bf16.xpose.msra.mxu0 0
  %176 = vmatpush.bf16.xpose.msra.mxu0 %v167
  %177 = vmatmul.bf16.gmra.mxu0 %v164
  %v178 = vpop.f32.mrf.mxu0
  %v179 = vadd.f32 %v130, %v178
  %v180 = vpop.f32.mrf.mxu0
  %181 = vdwg.mxu0
  %vm182 = vcmask 64512
  %v183 = vsel %vm182, %v155, -inf
  %184 = vmax.xlane.f32.xlu0 %v183
  %v185 = vpop.xlane.xlu0 %184
  %v186 = vsel %vm182, %v179, -inf
  %187 = vmax.xlane.f32.xlu0 %v186
  %v188 = vpop.xlane.xlu0 %187
  %v189 = vsub.f32 %v155, %v185
  %v190 = vsub.f32 %v179, %v188
  %v191 = vmul.f32 %v189, 1.442695
  %v192 = vpow.pop %v191
  %v193 = vmul.f32 %v190, 1.442695
  %v194 = vpow.pop %v193
  %v195 = vsel %vm182, %v192, 0.0
  %196 = vadd.xlane.f32.xlu0 %v195
  %v197 = vpop.xlane.xlu0 %196
  %v198 = vsel %vm182, %v194, 0.0
  %199 = vadd.xlane.f32.xlu0 %v198
  %v200 = vpop.xlane.xlu0 %199
  %v201 = vrcp.pop %v197
  %v202 = vrcp.pop %v200
  %v203 = vmul.f32 %v192, %v201
  %v204 = vmul.f32 %v194, %v202
  %v205 = vpack.c.bf16 %v203, %v203
  %v206 = vpack.c.bf16 %v204, %v204
  %207 = vrot.lane.b32.xlu0 %v135, 64
  %v208 = vpop.permute.xlu0 %207
  %v210 = vsel %vm182, %v205, 0
  %vm212 = vcmask 1043456
  %v214 = vsel %vm212, %v208, 0
  %216 = vmatpush.bf16.msra.mxu0 0
  %217 = vmatpush.bf16.msra.mxu0 0
  %218 = vmatpush.bf16.msra.mxu0 0
  %219 = vmatpush.bf16.msra.mxu0 0
  %220 = vmatpush.bf16.msra.mxu0 0
  %221 = vmatpush.bf16.msra.mxu0 0
  %222 = vmatpush.bf16.msra.mxu0 0
  %223 = vmatpush.bf16.msra.mxu0 %v214
  %224 = vmatmul.bf16.gmra.mxu0 %v210
  %v225 = vpop.f32.mrf.mxu0
  %v226 = vadd.f32 0.0, %v225
  %v227 = vpop.f32.mrf.mxu0
  %228 = vdwg.mxu0
  %229 = vrot.lane.b32.xlu0 %v160, 64
  %v230 = vpop.permute.xlu0 %229
  %v232 = vsel %vm182, %v206, 0
  %v235 = vsel %vm212, %v230, 0
  %237 = vmatpush.bf16.msra.mxu0 0
  %238 = vmatpush.bf16.msra.mxu0 0
  %239 = vmatpush.bf16.msra.mxu0 0
  %240 = vmatpush.bf16.msra.mxu0 0
  %241 = vmatpush.bf16.msra.mxu0 0
  %242 = vmatpush.bf16.msra.mxu0 0
  %243 = vmatpush.bf16.msra.mxu0 0
  %244 = vmatpush.bf16.msra.mxu0 %v235
  %245 = vmatmul.bf16.gmra.mxu0 %v232
  %v246 = vpop.f32.mrf.mxu0
  %v247 = vadd.f32 0.0, %v246
  %v248 = vpop.f32.mrf.mxu0
  %249 = vdwg.mxu0
  %v250 = vpack.c.bf16 %v247, %v226
  %v251 = vld [vmem:[%s2] sm:$0xf]
  %v252 = vld [vmem:[%s2 + $0x8] sm:$0xf]
  %v255 = vunpack.c.l.b16 %v251
  %v256 = vunpack.c.l.b16 %v252
  %v257 = vpack.c.b16 %v256, %v255
  %258 = vrot.lane.b32.xlu0 %v257, 32
  %v259 = vpop.permute.xlu0 %258
  %v262 = vsel %vm138, %v250, 0
  %264 = vmatpush.bf16.msra.mxu0 0
  %265 = vmatpush.bf16.msra.mxu0 0
  %266 = vmatpush.bf16.msra.mxu0 0
  %267 = vmatpush.bf16.msra.mxu0 0
  %268 = vmatpush.bf16.msra.mxu0 0
  %269 = vmatpush.bf16.msra.mxu0 0
  %270 = vmatpush.bf16.msra.mxu0 0
  %271 = vmatpush.bf16.msra.mxu0 %v259
  %272 = vmatmul.bf16.gmra.mxu0 %v262
  %v273 = vpop.f32.mrf.mxu0
  %v274 = vadd.f32 0.0, %v273
  %v275 = vpop.f32.mrf.mxu0
  %v276 = vadd.f32 0.0, %v275
  %277 = vdwg.mxu0
  %v278 = vperm.slane %v124, 0
  %v279 = vadd.f32 %v278, %v274
  %v280 = vadd.f32 %v278, %v276
  %281 = vrot.lane.b32.xlu0 %v135, 112
  %v282 = vpop.permute.xlu0 %281
  %283 = vrot.lane.b32.xlu0 %v135, 80
  %v284 = vpop.permute.xlu0 %283
  %v286 = vsel %vm138, %v282, 0
  %v289 = vsel %vm138, %v284, 0
  %291 = vmatpush.bf16.xpose.msra.mxu0 0
  %292 = vmatpush.bf16.xpose.msra.mxu0 0
  %293 = vmatpush.bf16.xpose.msra.mxu0 0
  %294 = vmatpush.bf16.xpose.msra.mxu0 0
  %295 = vmatpush.bf16.xpose.msra.mxu0 0
  %296 = vmatpush.bf16.xpose.msra.mxu0 0
  %297 = vmatpush.bf16.xpose.msra.mxu0 0
  %298 = vmatpush.bf16.xpose.msra.mxu0 %v289
  %299 = vmatmul.bf16.gmra.mxu0 %v286
  %v300 = vpop.f32.mrf.mxu0
  %v301 = vadd.f32 %v129, %v300
  %v302 = vpop.f32.mrf.mxu0
  %303 = vdwg.mxu0
  %304 = vrot.lane.b32.xlu0 %v160, 112
  %v305 = vpop.permute.xlu0 %304
  %306 = vrot.lane.b32.xlu0 %v160, 80
  %v307 = vpop.permute.xlu0 %306
  %v309 = vsel %vm138, %v305, 0
  %v312 = vsel %vm138, %v307, 0
  %314 = vmatpush.bf16.xpose.msra.mxu0 0
  %315 = vmatpush.bf16.xpose.msra.mxu0 0
  %316 = vmatpush.bf16.xpose.msra.mxu0 0
  %317 = vmatpush.bf16.xpose.msra.mxu0 0
  %318 = vmatpush.bf16.xpose.msra.mxu0 0
  %319 = vmatpush.bf16.xpose.msra.mxu0 0
  %320 = vmatpush.bf16.xpose.msra.mxu0 0
  %321 = vmatpush.bf16.xpose.msra.mxu0 %v312
  %322 = vmatmul.bf16.gmra.mxu0 %v309
  %v323 = vpop.f32.mrf.mxu0
  %v324 = vadd.f32 %v130, %v323
  %v325 = vpop.f32.mrf.mxu0
  %326 = vdwg.mxu0
  %v327 = vsel %vm182, %v301, -inf
  %328 = vmax.xlane.f32.xlu0 %v327
  %v329 = vpop.xlane.xlu0 %328
  %v330 = vsel %vm182, %v324, -inf
  %331 = vmax.xlane.f32.xlu0 %v330
  %v332 = vpop.xlane.xlu0 %331
  %v333 = vsub.f32 %v301, %v329
  %v334 = vsub.f32 %v324, %v332
  %v335 = vmul.f32 %v333, 1.442695
  %v336 = vpow.pop %v335
  %v337 = vmul.f32 %v334, 1.442695
  %v338 = vpow.pop %v337
  %v339 = vsel %vm182, %v336, 0.0
  %340 = vadd.xlane.f32.xlu0 %v339
  %v341 = vpop.xlane.xlu0 %340
  %v342 = vsel %vm182, %v338, 0.0
  %343 = vadd.xlane.f32.xlu0 %v342
  %v344 = vpop.xlane.xlu0 %343
  %v345 = vrcp.pop %v341
  %v346 = vrcp.pop %v344
  %v347 = vmul.f32 %v336, %v345
  %v348 = vmul.f32 %v338, %v346
  %v349 = vpack.c.bf16 %v347, %v347
  %v350 = vpack.c.bf16 %v348, %v348
  %351 = vrot.lane.b32.xlu0 %v135, 48
  %v352 = vpop.permute.xlu0 %351
  %v354 = vsel %vm182, %v349, 0
  %v357 = vsel %vm212, %v352, 0
  %359 = vmatpush.bf16.msra.mxu0 0
  %360 = vmatpush.bf16.msra.mxu0 0
  %361 = vmatpush.bf16.msra.mxu0 0
  %362 = vmatpush.bf16.msra.mxu0 0
  %363 = vmatpush.bf16.msra.mxu0 0
  %364 = vmatpush.bf16.msra.mxu0 0
  %365 = vmatpush.bf16.msra.mxu0 0
  %366 = vmatpush.bf16.msra.mxu0 %v357
  %367 = vmatmul.bf16.gmra.mxu0 %v354
  %v368 = vpop.f32.mrf.mxu0
  %v369 = vadd.f32 0.0, %v368
  %v370 = vpop.f32.mrf.mxu0
  %371 = vdwg.mxu0
  %372 = vrot.lane.b32.xlu0 %v160, 48
  %v373 = vpop.permute.xlu0 %372
  %v375 = vsel %vm182, %v350, 0
  %v378 = vsel %vm212, %v373, 0
  %380 = vmatpush.bf16.msra.mxu0 0
  %381 = vmatpush.bf16.msra.mxu0 0
  %382 = vmatpush.bf16.msra.mxu0 0
  %383 = vmatpush.bf16.msra.mxu0 0
  %384 = vmatpush.bf16.msra.mxu0 0
  %385 = vmatpush.bf16.msra.mxu0 0
  %386 = vmatpush.bf16.msra.mxu0 0
  %387 = vmatpush.bf16.msra.mxu0 %v378
  %388 = vmatmul.bf16.gmra.mxu0 %v375
  %v389 = vpop.f32.mrf.mxu0
  %v390 = vadd.f32 0.0, %v389
  %v391 = vpop.f32.mrf.mxu0
  %392 = vdwg.mxu0
  %v393 = vpack.c.bf16 %v390, %v369
  %v394 = vld [vmem:[%s2 + $0x10] sm:$0xf]
  %v395 = vld [vmem:[%s2 + $0x18] sm:$0xf]
  %v398 = vunpack.c.l.b16 %v394
  %v399 = vunpack.c.l.b16 %v395
  %v400 = vpack.c.b16 %v399, %v398
  %401 = vrot.lane.b32.xlu0 %v400, 32
  %v402 = vpop.permute.xlu0 %401
  %v405 = vsel %vm138, %v393, 0
  %407 = vmatpush.bf16.msra.mxu0 0
  %408 = vmatpush.bf16.msra.mxu0 0
  %409 = vmatpush.bf16.msra.mxu0 0
  %410 = vmatpush.bf16.msra.mxu0 0
  %411 = vmatpush.bf16.msra.mxu0 0
  %412 = vmatpush.bf16.msra.mxu0 0
  %413 = vmatpush.bf16.msra.mxu0 0
  %414 = vmatpush.bf16.msra.mxu0 %v402
  %415 = vmatmul.bf16.gmra.mxu0 %v405
  %v416 = vpop.f32.mrf.mxu0
  %v417 = vadd.f32 0.0, %v416
  %v418 = vpop.f32.mrf.mxu0
  %v419 = vadd.f32 0.0, %v418
  %420 = vdwg.mxu0
  %v421 = vadd.f32 %v279, %v417
  %v422 = vadd.f32 %v280, %v419
  %v423 = vadd.f32 %v86, %v421
  %v424 = vadd.f32 %v87, %v422
  %v425 = vsel %vm28, %v423, 0.0
  %426 = vadd.xlane.f32.xlu0 %v425
  %v427 = vpop.xlane.xlu0 %426
  %v428 = vsel %vm28, %v424, 0.0
  %429 = vadd.xlane.f32.xlu0 %v428
  %v430 = vpop.xlane.xlu0 %429
  %v431 = vmul.f32 %v427, %v41
  %v432 = vmul.f32 %v430, %v41
  %v433 = vsub.f32 %v423, %v431
  %v434 = vsub.f32 %v424, %v432
  %v435 = vmul.f32 %v433, %v433
  %v436 = vmul.f32 %v434, %v434
  %v437 = vsel %vm28, %v435, 0.0
  %438 = vadd.xlane.f32.xlu0 %v437
  %v439 = vpop.xlane.xlu0 %438
  %v440 = vsel %vm28, %v436, 0.0
  %441 = vadd.xlane.f32.xlu0 %v440
  %v442 = vpop.xlane.xlu0 %441
  %v443 = vmul.f32 %v439, %v41
  %v444 = vmul.f32 %v442, %v41
  %v445 = vadd.f32 %v443, 1e-12
  %v446 = vadd.f32 %v444, 1e-12
  %v447 = vrsqrt.pop %v445
  %v448 = vmul.f32 %v447, %v445
  %v449 = vmul.f32 %v448, %v447
  %v450 = vmul.f32 0.5, %v449
  %v451 = vsub.f32 1.5, %v450
  %v452 = vmul.f32 %v447, %v451
  %vm453 = vweird.f32 %v445
  %vm454 = vweird.f32 %v447
  %vm455 = vmor %vm453, %vm454
  %v456 = vsel %vm455, %v447, %v452
  %v457 = vrsqrt.pop %v446
  %v458 = vmul.f32 %v457, %v446
  %v459 = vmul.f32 %v458, %v457
  %v460 = vmul.f32 0.5, %v459
  %v461 = vsub.f32 1.5, %v460
  %v462 = vmul.f32 %v457, %v461
  %vm463 = vweird.f32 %v446
  %vm464 = vweird.f32 %v457
  %vm465 = vmor %vm463, %vm464
  %v466 = vsel %vm465, %v457, %v462
  %v467 = vmul.f32 %v433, %v456
  %v468 = vmul.f32 %v434, %v466
  %v469 = vld [vmem:[%s5 + $0x4] sm:$0x1]
  %v470 = vperm.slane %v469, 0
  %v471 = vmul.f32 %v467, %v470
  %v472 = vmul.f32 %v468, %v470
  %v473 = vld [vmem:[%s5 + $0x5] sm:$0x1]
  %v474 = vperm.slane %v473, 0
  %v475 = vadd.f32 %v471, %v474
  %v476 = vadd.f32 %v472, %v474
  %v477 = vpack.c.bf16 %v476, %v475
  %v478 = vld [vmem:[%s2 + $0x4] sm:$0xf]
  %v479 = vld [vmem:[%s2 + $0xc] sm:$0xf]
  %v480 = vld [vmem:[%s2 + $0x14] sm:$0xf]
  %v481 = vld [vmem:[%s2 + $0x1c] sm:$0xf]
  %v482 = vld [vmem:[%s5 + $0x6] sm:$0x1]
  %v483 = vperm.slane %v482, 0
  %v488 = vunpack.c.l.b16 %v478
  %v489 = vunpack.c.l.b16 %v479
  %v490 = vunpack.c.l.b16 %v480
  %v491 = vunpack.c.l.b16 %v481
  %v492 = vpack.c.b16 %v489, %v488
  %v493 = vpack.c.b16 %v491, %v490
  %v497 = vsel %vm28, %v477, 0
  %499 = vmatpush.bf16.msra.mxu0 0
  %500 = vmatpush.bf16.msra.mxu0 0
  %501 = vmatpush.bf16.msra.mxu0 0
  %502 = vmatpush.bf16.msra.mxu0 0
  %503 = vmatpush.bf16.msra.mxu0 0
  %504 = vmatpush.bf16.msra.mxu0 0
  %505 = vmatpush.bf16.msra.mxu0 %v493
  %506 = vmatpush.bf16.msra.mxu0 %v492
  %507 = vmatmul.bf16.gmra.mxu0 %v497
  %v508 = vpop.f32.mrf.mxu0
  %v509 = vadd.f32 %v483, %v508
  %v510 = vpop.f32.mrf.mxu0
  %v511 = vadd.f32 %v483, %v510
  %512 = vdwg.mxu0
  %v513 = vmul.f32 %v509, %v509
  %v514 = vmul.f32 %v511, %v511
  %v515 = vmul.f32 %v509, %v513
  %v516 = vmul.f32 %v511, %v514
  %v517 = vmul.f32 %v515, 0.044715
  %v518 = vmul.f32 %v516, 0.044715
  %v519 = vadd.f32 %v509, %v517
  %v520 = vadd.f32 %v511, %v518
  %v521 = vmul.f32 %v519, 0.7978846
  %v522 = vmul.f32 %v520, 0.7978846
  %v523 = vtanh.pop %v521
  %v524 = vtanh.pop %v522
  %v525 = vadd.f32 %v523, 1.0
  %v526 = vadd.f32 %v524, 1.0
  %v527 = vmul.f32 %v525, 0.5
  %v528 = vmul.f32 %v526, 0.5
  %v529 = vmul.f32 %v509, %v527
  %v530 = vmul.f32 %v511, %v528
  %v531 = vpack.c.bf16 %v530, %v529
  %v532 = vld [vmem:[%s3] sm:$0xf]
  %v533 = vld [vmem:[%s3 + $0x4] sm:$0xf]
  %v534 = vld [vmem:[%s3 + $0x8] sm:$0xf]
  %v535 = vld [vmem:[%s3 + $0xc] sm:$0xf]
  %v536 = vld [vmem:[%s3 + $0x10] sm:$0xf]
  %v537 = vld [vmem:[%s3 + $0x14] sm:$0xf]
  %v538 = vld [vmem:[%s3 + $0x18] sm:$0xf]
  %v539 = vld [vmem:[%s3 + $0x1c] sm:$0xf]
  %v540 = vld [vmem:[%s3 + $0x20] sm:$0xf]
  %v541 = vld [vmem:[%s3 + $0x24] sm:$0xf]
  %v542 = vld [vmem:[%s3 + $0x28] sm:$0xf]
  %v543 = vld [vmem:[%s3 + $0x2c] sm:$0xf]
  %v544 = vld [vmem:[%s3 + $0x30] sm:$0xf]
  %v545 = vld [vmem:[%s3 + $0x34] sm:$0xf]
  %v546 = vld [vmem:[%s3 + $0x38] sm:$0xf]
  %v547 = vld [vmem:[%s3 + $0x3c] sm:$0xf]
  %v548 = vld [vmem:[%s5 + $0x7] sm:$0x1]
  %v549 = vperm.slane %v548, 0
  %v566 = vunpack.c.l.b16 %v532
  %v567 = vunpack.c.l.b16 %v533
  %v568 = vunpack.c.l.b16 %v534
  %v569 = vunpack.c.l.b16 %v535
  %v570 = vunpack.c.l.b16 %v536
  %v571 = vunpack.c.l.b16 %v537
  %v572 = vunpack.c.l.b16 %v538
  %v573 = vunpack.c.l.b16 %v539
  %v574 = vunpack.c.l.b16 %v540
  %v575 = vunpack.c.l.b16 %v541
  %v576 = vunpack.c.l.b16 %v542
  %v577 = vunpack.c.l.b16 %v543
  %v578 = vunpack.c.l.b16 %v544
  %v579 = vunpack.c.l.b16 %v545
  %v580 = vunpack.c.l.b16 %v546
  %v581 = vunpack.c.l.b16 %v547
  %v582 = vpack.c.b16 %v567, %v566
  %v583 = vpack.c.b16 %v569, %v568
  %v584 = vpack.c.b16 %v571, %v570
  %v585 = vpack.c.b16 %v573, %v572
  %v586 = vpack.c.b16 %v575, %v574
  %v587 = vpack.c.b16 %v577, %v576
  %v588 = vpack.c.b16 %v579, %v578
  %v589 = vpack.c.b16 %v581, %v580
  %598 = vmatpush.bf16.msra.mxu0 %v589
  %599 = vmatpush.bf16.msra.mxu0 %v588
  %600 = vmatpush.bf16.msra.mxu0 %v587
  %601 = vmatpush.bf16.msra.mxu0 %v586
  %602 = vmatpush.bf16.msra.mxu0 %v585
  %603 = vmatpush.bf16.msra.mxu0 %v584
  %604 = vmatpush.bf16.msra.mxu0 %v583
  %605 = vmatpush.bf16.msra.mxu0 %v582
  %606 = vmatmul.bf16.gmra.mxu0 %v531
  %v607 = vpop.f32.mrf.mxu0
  %v608 = vadd.f32 %v549, %v607
  %v609 = vpop.f32.mrf.mxu0
  %v610 = vadd.f32 %v549, %v609
  %611 = vdwg.mxu0
  %v612 = vadd.f32 %v475, %v608
  %v613 = vadd.f32 %v476, %v610
  %v614 = vsel %vm28, %v612, 0.0
  %615 = vadd.xlane.f32.xlu0 %v614
  %v616 = vpop.xlane.xlu0 %615
  %v617 = vsel %vm28, %v613, 0.0
  %618 = vadd.xlane.f32.xlu0 %v617
  %v619 = vpop.xlane.xlu0 %618
  %v620 = vmul.f32 %v616, %v41
  %v621 = vmul.f32 %v619, %v41
  %v622 = vsub.f32 %v612, %v620
  %v623 = vsub.f32 %v613, %v621
  %v624 = vmul.f32 %v622, %v622
  %v625 = vmul.f32 %v623, %v623
  %v626 = vsel %vm28, %v624, 0.0
  %627 = vadd.xlane.f32.xlu0 %v626
  %v628 = vpop.xlane.xlu0 %627
  %v629 = vsel %vm28, %v625, 0.0
  %630 = vadd.xlane.f32.xlu0 %v629
  %v631 = vpop.xlane.xlu0 %630
  %v632 = vmul.f32 %v628, %v41
  %v633 = vmul.f32 %v631, %v41
  %v634 = vadd.f32 %v632, 1e-12
  %v635 = vadd.f32 %v633, 1e-12
  %v636 = vrsqrt.pop %v634
  %v637 = vmul.f32 %v636, %v634
  %v638 = vmul.f32 %v637, %v636
  %v639 = vmul.f32 0.5, %v638
  %v640 = vsub.f32 1.5, %v639
  %v641 = vmul.f32 %v636, %v640
  %vm642 = vweird.f32 %v634
  %vm643 = vweird.f32 %v636
  %vm644 = vmor %vm642, %vm643
  %v645 = vsel %vm644, %v636, %v641
  %v646 = vrsqrt.pop %v635
  %v647 = vmul.f32 %v646, %v635
  %v648 = vmul.f32 %v647, %v646
  %v649 = vmul.f32 0.5, %v648
  %v650 = vsub.f32 1.5, %v649
  %v651 = vmul.f32 %v646, %v650
  %vm652 = vweird.f32 %v635
  %vm653 = vweird.f32 %v646
  %vm654 = vmor %vm652, %vm653
  %v655 = vsel %vm654, %v646, %v651
  %v656 = vmul.f32 %v622, %v645
  %v657 = vmul.f32 %v623, %v655
  %v658 = vld [vmem:[%s5 + $0x8] sm:$0x1]
  %v659 = vperm.slane %v658, 0
  %v660 = vmul.f32 %v656, %v659
  %v661 = vmul.f32 %v657, %v659
  %v662 = vld [vmem:[%s5 + $0x9] sm:$0x1]
  %v663 = vperm.slane %v662, 0
  %v664 = vadd.f32 %v660, %v663
  %v665 = vadd.f32 %v661, %v663
  %v666 = vpack.c.bf16 %v665, %v664
  %s667 = scalar_lea.vmem %s2, 32
  %v668 = vld [vmem:[%s667] sm:$0xf]
  %v669 = vld [vmem:[%s667 + $0x8] sm:$0xf]
  %v670 = vld [vmem:[%s667 + $0x10] sm:$0xf]
  %v671 = vld [vmem:[%s667 + $0x18] sm:$0xf]
  %v672 = vld [vmem:[%s5 + $0xa] sm:$0x1]
  %v673 = vperm.slane %v672, 0
  %v678 = vunpack.c.l.b16 %v668
  %v679 = vunpack.c.l.b16 %v669
  %v680 = vunpack.c.l.b16 %v670
  %v681 = vunpack.c.l.b16 %v671
  %v682 = vpack.c.b16 %v679, %v678
  %v683 = vpack.c.b16 %v681, %v680
  %v687 = vsel %vm28, %v666, 0
  %689 = vmatpush.bf16.msra.mxu0 0
  %690 = vmatpush.bf16.msra.mxu0 0
  %691 = vmatpush.bf16.msra.mxu0 0
  %692 = vmatpush.bf16.msra.mxu0 0
  %693 = vmatpush.bf16.msra.mxu0 0
  %694 = vmatpush.bf16.msra.mxu0 0
  %695 = vmatpush.bf16.msra.mxu0 %v683
  %696 = vmatpush.bf16.msra.mxu0 %v682
  %697 = vmatmul.bf16.gmra.mxu0 %v687
  %v698 = vpop.f32.mrf.mxu0
  %v699 = vadd.f32 %v673, %v698
  %v700 = vpop.f32.mrf.mxu0
  %v701 = vadd.f32 %v673, %v700
  %702 = vdwg.mxu0
  %v703 = vld [vmem:[%s5 + $0xb] sm:$0x1]
  %v704 = vpack.c.bf16 %v699, %v699
  %v705 = vpack.c.bf16 %v701, %v701
  %v707 = vunpack.c.l.b16 %v704
  %v708 = vpack.c.b16 %v707, %v707
  %709 = vrot.lane.b32.xlu0 %v708, 96
  %v710 = vpop.permute.xlu0 %709
  %v712 = vsel %vm138, %v704, 0
  %v715 = vsel %vm138, %v710, 0
  %717 = vmatpush.bf16.xpose.msra.mxu0 0
  %718 = vmatpush.bf16.xpose.msra.mxu0 0
  %719 = vmatpush.bf16.xpose.msra.mxu0 0
  %720 = vmatpush.bf16.xpose.msra.mxu0 0
  %721 = vmatpush.bf16.xpose.msra.mxu0 0
  %722 = vmatpush.bf16.xpose.msra.mxu0 0
  %723 = vmatpush.bf16.xpose.msra.mxu0 0
  %724 = vmatpush.bf16.xpose.msra.mxu0 %v715
  %725 = vmatmul.bf16.gmra.mxu0 %v712
  %v726 = vpop.f32.mrf.mxu0
  %v727 = vadd.f32 %v129, %v726
  %v728 = vpop.f32.mrf.mxu0
  %729 = vdwg.mxu0
  %v731 = vunpack.c.l.b16 %v705
  %v732 = vpack.c.b16 %v731, %v731
  %733 = vrot.lane.b32.xlu0 %v732, 96
  %v734 = vpop.permute.xlu0 %733
  %v736 = vsel %vm138, %v705, 0
  %v739 = vsel %vm138, %v734, 0
  %741 = vmatpush.bf16.xpose.msra.mxu0 0
  %742 = vmatpush.bf16.xpose.msra.mxu0 0
  %743 = vmatpush.bf16.xpose.msra.mxu0 0
  %744 = vmatpush.bf16.xpose.msra.mxu0 0
  %745 = vmatpush.bf16.xpose.msra.mxu0 0
  %746 = vmatpush.bf16.xpose.msra.mxu0 0
  %747 = vmatpush.bf16.xpose.msra.mxu0 0
  %748 = vmatpush.bf16.xpose.msra.mxu0 %v739
  %749 = vmatmul.bf16.gmra.mxu0 %v736
  %v750 = vpop.f32.mrf.mxu0
  %v751 = vadd.f32 %v130, %v750
  %v752 = vpop.f32.mrf.mxu0
  %753 = vdwg.mxu0
  %v754 = vsel %vm182, %v727, -inf
  %755 = vmax.xlane.f32.xlu0 %v754
  %v756 = vpop.xlane.xlu0 %755
  %v757 = vsel %vm182, %v751, -inf
  %758 = vmax.xlane.f32.xlu0 %v757
  %v759 = vpop.xlane.xlu0 %758
  %v760 = vsub.f32 %v727, %v756
  %v761 = vsub.f32 %v751, %v759
  %v762 = vmul.f32 %v760, 1.442695
  %v763 = vpow.pop %v762
  %v764 = vmul.f32 %v761, 1.442695
  %v765 = vpow.pop %v764
  %v766 = vsel %vm182, %v763, 0.0
  %767 = vadd.xlane.f32.xlu0 %v766
  %v768 = vpop.xlane.xlu0 %767
  %v769 = vsel %vm182, %v765, 0.0
  %770 = vadd.xlane.f32.xlu0 %v769
  %v771 = vpop.xlane.xlu0 %770
  %v772 = vrcp.pop %v768
  %v773 = vrcp.pop %v771
  %v774 = vmul.f32 %v763, %v772
  %v775 = vmul.f32 %v765, %v773
  %v776 = vpack.c.bf16 %v774, %v774
  %v777 = vpack.c.bf16 %v775, %v775
  %778 = vrot.lane.b32.xlu0 %v708, 64
  %v779 = vpop.permute.xlu0 %778
  %v781 = vsel %vm182, %v776, 0
  %v784 = vsel %vm212, %v779, 0
  %786 = vmatpush.bf16.msra.mxu0 0
  %787 = vmatpush.bf16.msra.mxu0 0
  %788 = vmatpush.bf16.msra.mxu0 0
  %789 = vmatpush.bf16.msra.mxu0 0
  %790 = vmatpush.bf16.msra.mxu0 0
  %791 = vmatpush.bf16.msra.mxu0 0
  %792 = vmatpush.bf16.msra.mxu0 0
  %793 = vmatpush.bf16.msra.mxu0 %v784
  %794 = vmatmul.bf16.gmra.mxu0 %v781
  %v795 = vpop.f32.mrf.mxu0
  %v796 = vadd.f32 0.0, %v795
  %v797 = vpop.f32.mrf.mxu0
  %798 = vdwg.mxu0
  %799 = vrot.lane.b32.xlu0 %v732, 64
  %v800 = vpop.permute.xlu0 %799
  %v802 = vsel %vm182, %v777, 0
  %v805 = vsel %vm212, %v800, 0
  %807 = vmatpush.bf16.msra.mxu0 0
  %808 = vmatpush.bf16.msra.mxu0 0
  %809 = vmatpush.bf16.msra.mxu0 0
  %810 = vmatpush.bf16.msra.mxu0 0
  %811 = vmatpush.bf16.msra.mxu0 0
  %812 = vmatpush.bf16.msra.mxu0 0
  %813 = vmatpush.bf16.msra.mxu0 0
  %814 = vmatpush.bf16.msra.mxu0 %v805
  %815 = vmatmul.bf16.gmra.mxu0 %v802
  %v816 = vpop.f32.mrf.mxu0
  %v817 = vadd.f32 0.0, %v816
  %v818 = vpop.f32.mrf.mxu0
  %819 = vdwg.mxu0
  %v820 = vpack.c.bf16 %v817, %v796
  %v821 = vld [vmem:[%s667] sm:$0xf]
  %v822 = vld [vmem:[%s667 + $0x8] sm:$0xf]
  %v825 = vunpack.c.l.b16 %v821
  %v826 = vunpack.c.l.b16 %v822
  %v827 = vpack.c.b16 %v826, %v825
  %828 = vrot.lane.b32.xlu0 %v827, 32
  %v829 = vpop.permute.xlu0 %828
  %v832 = vsel %vm138, %v820, 0
  %834 = vmatpush.bf16.msra.mxu0 0
  %835 = vmatpush.bf16.msra.mxu0 0
  %836 = vmatpush.bf16.msra.mxu0 0
  %837 = vmatpush.bf16.msra.mxu0 0
  %838 = vmatpush.bf16.msra.mxu0 0
  %839 = vmatpush.bf16.msra.mxu0 0
  %840 = vmatpush.bf16.msra.mxu0 0
  %841 = vmatpush.bf16.msra.mxu0 %v829
  %842 = vmatmul.bf16.gmra.mxu0 %v832
  %v843 = vpop.f32.mrf.mxu0
  %v844 = vadd.f32 0.0, %v843
  %v845 = vpop.f32.mrf.mxu0
  %v846 = vadd.f32 0.0, %v845
  %847 = vdwg.mxu0
  %v848 = vperm.slane %v703, 0
  %v849 = vadd.f32 %v848, %v844
  %v850 = vadd.f32 %v848, %v846
  %851 = vrot.lane.b32.xlu0 %v708, 112
  %v852 = vpop.permute.xlu0 %851
  %853 = vrot.lane.b32.xlu0 %v708, 80
  %v854 = vpop.permute.xlu0 %853
  %v856 = vsel %vm138, %v852, 0
  %v859 = vsel %vm138, %v854, 0
  %861 = vmatpush.bf16.xpose.msra.mxu0 0
  %862 = vmatpush.bf16.xpose.msra.mxu0 0
  %863 = vmatpush.bf16.xpose.msra.mxu0 0
  %864 = vmatpush.bf16.xpose.msra.mxu0 0
  %865 = vmatpush.bf16.xpose.msra.mxu0 0
  %866 = vmatpush.bf16.xpose.msra.mxu0 0
  %867 = vmatpush.bf16.xpose.msra.mxu0 0
  %868 = vmatpush.bf16.xpose.msra.mxu0 %v859
  %869 = vmatmul.bf16.gmra.mxu0 %v856
  %v870 = vpop.f32.mrf.mxu0
  %v871 = vadd.f32 %v129, %v870
  %v872 = vpop.f32.mrf.mxu0
  %873 = vdwg.mxu0
  %874 = vrot.lane.b32.xlu0 %v732, 112
  %v875 = vpop.permute.xlu0 %874
  %876 = vrot.lane.b32.xlu0 %v732, 80
  %v877 = vpop.permute.xlu0 %876
  %v879 = vsel %vm138, %v875, 0
  %v882 = vsel %vm138, %v877, 0
  %884 = vmatpush.bf16.xpose.msra.mxu0 0
  %885 = vmatpush.bf16.xpose.msra.mxu0 0
  %886 = vmatpush.bf16.xpose.msra.mxu0 0
  %887 = vmatpush.bf16.xpose.msra.mxu0 0
  %888 = vmatpush.bf16.xpose.msra.mxu0 0
  %889 = vmatpush.bf16.xpose.msra.mxu0 0
  %890 = vmatpush.bf16.xpose.msra.mxu0 0
  %891 = vmatpush.bf16.xpose.msra.mxu0 %v882
  %892 = vmatmul.bf16.gmra.mxu0 %v879
  %v893 = vpop.f32.mrf.mxu0
  %v894 = vadd.f32 %v130, %v893
  %v895 = vpop.f32.mrf.mxu0
  %896 = vdwg.mxu0
  %v897 = vsel %vm182, %v871, -inf
  %898 = vmax.xlane.f32.xlu0 %v897
  %v899 = vpop.xlane.xlu0 %898
  %v900 = vsel %vm182, %v894, -inf
  %901 = vmax.xlane.f32.xlu0 %v900
  %v902 = vpop.xlane.xlu0 %901
  %v903 = vsub.f32 %v871, %v899
  %v904 = vsub.f32 %v894, %v902
  %v905 = vmul.f32 %v903, 1.442695
  %v906 = vpow.pop %v905
  %v907 = vmul.f32 %v904, 1.442695
  %v908 = vpow.pop %v907
  %v909 = vsel %vm182, %v906, 0.0
  %910 = vadd.xlane.f32.xlu0 %v909
  %v911 = vpop.xlane.xlu0 %910
  %v912 = vsel %vm182, %v908, 0.0
  %913 = vadd.xlane.f32.xlu0 %v912
  %v914 = vpop.xlane.xlu0 %913
  %v915 = vrcp.pop %v911
  %v916 = vrcp.pop %v914
  %v917 = vmul.f32 %v906, %v915
  %v918 = vmul.f32 %v908, %v916
  %v919 = vpack.c.bf16 %v917, %v917
  %v920 = vpack.c.bf16 %v918, %v918
  %921 = vrot.lane.b32.xlu0 %v708, 48
  %v922 = vpop.permute.xlu0 %921
  %v924 = vsel %vm182, %v919, 0
  %v927 = vsel %vm212, %v922, 0
  %929 = vmatpush.bf16.msra.mxu0 0
  %930 = vmatpush.bf16.msra.mxu0 0
  %931 = vmatpush.bf16.msra.mxu0 0
  %932 = vmatpush.bf16.msra.mxu0 0
  %933 = vmatpush.bf16.msra.mxu0 0
  %934 = vmatpush.bf16.msra.mxu0 0
  %935 = vmatpush.bf16.msra.mxu0 0
  %936 = vmatpush.bf16.msra.mxu0 %v927
  %937 = vmatmul.bf16.gmra.mxu0 %v924
  %v938 = vpop.f32.mrf.mxu0
  %v939 = vadd.f32 0.0, %v938
  %v940 = vpop.f32.mrf.mxu0
  %941 = vdwg.mxu0
  %942 = vrot.lane.b32.xlu0 %v732, 48
  %v943 = vpop.permute.xlu0 %942
  %v945 = vsel %vm182, %v920, 0
  %v948 = vsel %vm212, %v943, 0
  %950 = vmatpush.bf16.msra.mxu0 0
  %951 = vmatpush.bf16.msra.mxu0 0
  %952 = vmatpush.bf16.msra.mxu0 0
  %953 = vmatpush.bf16.msra.mxu0 0
  %954 = vmatpush.bf16.msra.mxu0 0
  %955 = vmatpush.bf16.msra.mxu0 0
  %956 = vmatpush.bf16.msra.mxu0 0
  %957 = vmatpush.bf16.msra.mxu0 %v948
  %958 = vmatmul.bf16.gmra.mxu0 %v945
  %v959 = vpop.f32.mrf.mxu0
  %v960 = vadd.f32 0.0, %v959
  %v961 = vpop.f32.mrf.mxu0
  %962 = vdwg.mxu0
  %v963 = vpack.c.bf16 %v960, %v939
  %v964 = vld [vmem:[%s667 + $0x10] sm:$0xf]
  %v965 = vld [vmem:[%s667 + $0x18] sm:$0xf]
  %v968 = vunpack.c.l.b16 %v964
  %v969 = vunpack.c.l.b16 %v965
  %v970 = vpack.c.b16 %v969, %v968
  %971 = vrot.lane.b32.xlu0 %v970, 32
  %v972 = vpop.permute.xlu0 %971
  %v975 = vsel %vm138, %v963, 0
  %977 = vmatpush.bf16.msra.mxu0 0
  %978 = vmatpush.bf16.msra.mxu0 0
  %979 = vmatpush.bf16.msra.mxu0 0
  %980 = vmatpush.bf16.msra.mxu0 0
  %981 = vmatpush.bf16.msra.mxu0 0
  %982 = vmatpush.bf16.msra.mxu0 0
  %983 = vmatpush.bf16.msra.mxu0 0
  %984 = vmatpush.bf16.msra.mxu0 %v972
  %985 = vmatmul.bf16.gmra.mxu0 %v975
  %v986 = vpop.f32.mrf.mxu0
  %v987 = vadd.f32 0.0, %v986
  %v988 = vpop.f32.mrf.mxu0
  %v989 = vadd.f32 0.0, %v988
  %990 = vdwg.mxu0
  %v991 = vadd.f32 %v849, %v987
  %v992 = vadd.f32 %v850, %v989
  %v993 = vadd.f32 %v664, %v991
  %v994 = vadd.f32 %v665, %v992
  %v995 = vsel %vm28, %v993, 0.0
  %996 = vadd.xlane.f32.xlu0 %v995
  %v997 = vpop.xlane.xlu0 %996
  %v998 = vsel %vm28, %v994, 0.0
  %999 = vadd.xlane.f32.xlu0 %v998
  %v1000 = vpop.xlane.xlu0 %999
  %v1001 = vmul.f32 %v997, %v41
  %v1002 = vmul.f32 %v1000, %v41
  %v1003 = vsub.f32 %v993, %v1001
  %v1004 = vsub.f32 %v994, %v1002
  %v1005 = vmul.f32 %v1003, %v1003
  %v1006 = vmul.f32 %v1004, %v1004
  %v1007 = vsel %vm28, %v1005, 0.0
  %1008 = vadd.xlane.f32.xlu0 %v1007
  %v1009 = vpop.xlane.xlu0 %1008
  %v1010 = vsel %vm28, %v1006, 0.0
  %1011 = vadd.xlane.f32.xlu0 %v1010
  %v1012 = vpop.xlane.xlu0 %1011
  %v1013 = vmul.f32 %v1009, %v41
  %v1014 = vmul.f32 %v1012, %v41
  %v1015 = vadd.f32 %v1013, 1e-12
  %v1016 = vadd.f32 %v1014, 1e-12
  %v1017 = vrsqrt.pop %v1015
  %v1018 = vmul.f32 %v1017, %v1015
  %v1019 = vmul.f32 %v1018, %v1017
  %v1020 = vmul.f32 0.5, %v1019
  %v1021 = vsub.f32 1.5, %v1020
  %v1022 = vmul.f32 %v1017, %v1021
  %vm1023 = vweird.f32 %v1015
  %vm1024 = vweird.f32 %v1017
  %vm1025 = vmor %vm1023, %vm1024
  %v1026 = vsel %vm1025, %v1017, %v1022
  %v1027 = vrsqrt.pop %v1016
  %v1028 = vmul.f32 %v1027, %v1016
  %v1029 = vmul.f32 %v1028, %v1027
  %v1030 = vmul.f32 0.5, %v1029
  %v1031 = vsub.f32 1.5, %v1030
  %v1032 = vmul.f32 %v1027, %v1031
  %vm1033 = vweird.f32 %v1016
  %vm1034 = vweird.f32 %v1027
  %vm1035 = vmor %vm1033, %vm1034
  %v1036 = vsel %vm1035, %v1027, %v1032
  %v1037 = vmul.f32 %v1003, %v1026
  %v1038 = vmul.f32 %v1004, %v1036
  %v1039 = vld [vmem:[%s5 + $0xc] sm:$0x1]
  %v1040 = vperm.slane %v1039, 0
  %v1041 = vmul.f32 %v1037, %v1040
  %v1042 = vmul.f32 %v1038, %v1040
  %v1043 = vld [vmem:[%s5 + $0xd] sm:$0x1]
  %v1044 = vperm.slane %v1043, 0
  %v1045 = vadd.f32 %v1041, %v1044
  %v1046 = vadd.f32 %v1042, %v1044
  %v1047 = vpack.c.bf16 %v1046, %v1045
  %v1048 = vld [vmem:[%s667 + $0x4] sm:$0xf]
  %v1049 = vld [vmem:[%s667 + $0xc] sm:$0xf]
  %v1050 = vld [vmem:[%s667 + $0x14] sm:$0xf]
  %v1051 = vld [vmem:[%s667 + $0x1c] sm:$0xf]
  %v1052 = vld [vmem:[%s5 + $0xe] sm:$0x1]
  %v1053 = vperm.slane %v1052, 0
  %v1058 = vunpack.c.l.b16 %v1048
  %v1059 = vunpack.c.l.b16 %v1049
  %v1060 = vunpack.c.l.b16 %v1050
  %v1061 = vunpack.c.l.b16 %v1051
  %v1062 = vpack.c.b16 %v1059, %v1058
  %v1063 = vpack.c.b16 %v1061, %v1060
  %v1067 = vsel %vm28, %v1047, 0
  %1069 = vmatpush.bf16.msra.mxu0 0
  %1070 = vmatpush.bf16.msra.mxu0 0
  %1071 = vmatpush.bf16.msra.mxu0 0
  %1072 = vmatpush.bf16.msra.mxu0 0
  %1073 = vmatpush.bf16.msra.mxu0 0
  %1074 = vmatpush.bf16.msra.mxu0 0
  %1075 = vmatpush.bf16.msra.mxu0 %v1063
  %1076 = vmatpush.bf16.msra.mxu0 %v1062
  %1077 = vmatmul.bf16.gmra.mxu0 %v1067
  %v1078 = vpop.f32.mrf.mxu0
  %v1079 = vadd.f32 %v1053, %v1078
  %v1080 = vpop.f32.mrf.mxu0
  %v1081 = vadd.f32 %v1053, %v1080
  %1082 = vdwg.mxu0
  %v1083 = vmul.f32 %v1079, %v1079
  %v1084 = vmul.f32 %v1081, %v1081
  %v1085 = vmul.f32 %v1079, %v1083
  %v1086 = vmul.f32 %v1081, %v1084
  %v1087 = vmul.f32 %v1085, 0.044715
  %v1088 = vmul.f32 %v1086, 0.044715
  %v1089 = vadd.f32 %v1079, %v1087
  %v1090 = vadd.f32 %v1081, %v1088
  %v1091 = vmul.f32 %v1089, 0.7978846
  %v1092 = vmul.f32 %v1090, 0.7978846
  %v1093 = vtanh.pop %v1091
  %v1094 = vtanh.pop %v1092
  %v1095 = vadd.f32 %v1093, 1.0
  %v1096 = vadd.f32 %v1094, 1.0
  %v1097 = vmul.f32 %v1095, 0.5
  %v1098 = vmul.f32 %v1096, 0.5
  %v1099 = vmul.f32 %v1079, %v1097
  %v1100 = vmul.f32 %v1081, %v1098
  %v1101 = vpack.c.bf16 %v1100, %v1099
  %s1102 = scalar_lea.vmem %s3, 64
  %v1103 = vld [vmem:[%s1102] sm:$0xf]
  %v1104 = vld [vmem:[%s1102 + $0x4] sm:$0xf]
  %v1105 = vld [vmem:[%s1102 + $0x8] sm:$0xf]
  %v1106 = vld [vmem:[%s1102 + $0xc] sm:$0xf]
  %v1107 = vld [vmem:[%s1102 + $0x10] sm:$0xf]
  %v1108 = vld [vmem:[%s1102 + $0x14] sm:$0xf]
  %v1109 = vld [vmem:[%s1102 + $0x18] sm:$0xf]
  %v1110 = vld [vmem:[%s1102 + $0x1c] sm:$0xf]
  %v1111 = vld [vmem:[%s1102 + $0x20] sm:$0xf]
  %v1112 = vld [vmem:[%s1102 + $0x24] sm:$0xf]
  %v1113 = vld [vmem:[%s1102 + $0x28] sm:$0xf]
  %v1114 = vld [vmem:[%s1102 + $0x2c] sm:$0xf]
  %v1115 = vld [vmem:[%s1102 + $0x30] sm:$0xf]
  %v1116 = vld [vmem:[%s1102 + $0x34] sm:$0xf]
  %v1117 = vld [vmem:[%s1102 + $0x38] sm:$0xf]
  %v1118 = vld [vmem:[%s1102 + $0x3c] sm:$0xf]
  %v1119 = vld [vmem:[%s5 + $0xf] sm:$0x1]
  %v1120 = vperm.slane %v1119, 0
  %v1137 = vunpack.c.l.b16 %v1103
  %v1138 = vunpack.c.l.b16 %v1104
  %v1139 = vunpack.c.l.b16 %v1105
  %v1140 = vunpack.c.l.b16 %v1106
  %v1141 = vunpack.c.l.b16 %v1107
  %v1142 = vunpack.c.l.b16 %v1108
  %v1143 = vunpack.c.l.b16 %v1109
  %v1144 = vunpack.c.l.b16 %v1110
  %v1145 = vunpack.c.l.b16 %v1111
  %v1146 = vunpack.c.l.b16 %v1112
  %v1147 = vunpack.c.l.b16 %v1113
  %v1148 = vunpack.c.l.b16 %v1114
  %v1149 = vunpack.c.l.b16 %v1115
  %v1150 = vunpack.c.l.b16 %v1116
  %v1151 = vunpack.c.l.b16 %v1117
  %v1152 = vunpack.c.l.b16 %v1118
  %v1153 = vpack.c.b16 %v1138, %v1137
  %v1154 = vpack.c.b16 %v1140, %v1139
  %v1155 = vpack.c.b16 %v1142, %v1141
  %v1156 = vpack.c.b16 %v1144, %v1143
  %v1157 = vpack.c.b16 %v1146, %v1145
  %v1158 = vpack.c.b16 %v1148, %v1147
  %v1159 = vpack.c.b16 %v1150, %v1149
  %v1160 = vpack.c.b16 %v1152, %v1151
  %1169 = vmatpush.bf16.msra.mxu0 %v1160
  %1170 = vmatpush.bf16.msra.mxu0 %v1159
  %1171 = vmatpush.bf16.msra.mxu0 %v1158
  %1172 = vmatpush.bf16.msra.mxu0 %v1157
  %1173 = vmatpush.bf16.msra.mxu0 %v1156
  %1174 = vmatpush.bf16.msra.mxu0 %v1155
  %1175 = vmatpush.bf16.msra.mxu0 %v1154
  %1176 = vmatpush.bf16.msra.mxu0 %v1153
  %1177 = vmatmul.bf16.gmra.mxu0 %v1101
  %v1178 = vpop.f32.mrf.mxu0
  %v1179 = vadd.f32 %v1120, %v1178
  %v1180 = vpop.f32.mrf.mxu0
  %v1181 = vadd.f32 %v1120, %v1180
  %1182 = vdwg.mxu0
  %v1183 = vadd.f32 %v1045, %v1179
  %v1184 = vadd.f32 %v1046, %v1181
  %v1185 = vsel %vm28, %v1183, 0.0
  %1186 = vadd.xlane.f32.xlu0 %v1185
  %v1187 = vpop.xlane.xlu0 %1186
  %v1188 = vsel %vm28, %v1184, 0.0
  %1189 = vadd.xlane.f32.xlu0 %v1188
  %v1190 = vpop.xlane.xlu0 %1189
  %v1191 = vmul.f32 %v1187, %v41
  %v1192 = vmul.f32 %v1190, %v41
  %v1193 = vsub.f32 %v1183, %v1191
  %v1194 = vsub.f32 %v1184, %v1192
  %v1195 = vmul.f32 %v1193, %v1193
  %v1196 = vmul.f32 %v1194, %v1194
  %v1197 = vsel %vm28, %v1195, 0.0
  %1198 = vadd.xlane.f32.xlu0 %v1197
  %v1199 = vpop.xlane.xlu0 %1198
  %v1200 = vsel %vm28, %v1196, 0.0
  %1201 = vadd.xlane.f32.xlu0 %v1200
  %v1202 = vpop.xlane.xlu0 %1201
  %v1203 = vmul.f32 %v1199, %v41
  %v1204 = vmul.f32 %v1202, %v41
  %v1205 = vadd.f32 %v1203, 1e-12
  %v1206 = vadd.f32 %v1204, 1e-12
  %v1207 = vrsqrt.pop %v1205
  %v1208 = vmul.f32 %v1207, %v1205
  %v1209 = vmul.f32 %v1208, %v1207
  %v1210 = vmul.f32 0.5, %v1209
  %v1211 = vsub.f32 1.5, %v1210
  %v1212 = vmul.f32 %v1207, %v1211
  %vm1213 = vweird.f32 %v1205
  %vm1214 = vweird.f32 %v1207
  %vm1215 = vmor %vm1213, %vm1214
  %v1216 = vsel %vm1215, %v1207, %v1212
  %v1217 = vrsqrt.pop %v1206
  %v1218 = vmul.f32 %v1217, %v1206
  %v1219 = vmul.f32 %v1218, %v1217
  %v1220 = vmul.f32 0.5, %v1219
  %v1221 = vsub.f32 1.5, %v1220
  %v1222 = vmul.f32 %v1217, %v1221
  %vm1223 = vweird.f32 %v1206
  %vm1224 = vweird.f32 %v1217
  %vm1225 = vmor %vm1223, %vm1224
  %v1226 = vsel %vm1225, %v1217, %v1222
  %v1227 = vmul.f32 %v1193, %v1216
  %v1228 = vmul.f32 %v1194, %v1226
  %v1229 = vld [vmem:[%s5 + $0x10] sm:$0x1]
  %v1230 = vperm.slane %v1229, 0
  %v1231 = vmul.f32 %v1227, %v1230
  %v1232 = vmul.f32 %v1228, %v1230
  %v1233 = vld [vmem:[%s5 + $0x11] sm:$0x1]
  %v1234 = vperm.slane %v1233, 0
  %v1235 = vadd.f32 %v1231, %v1234
  %v1236 = vadd.f32 %v1232, %v1234
  %v1237 = vpack.c.bf16 %v1235, %v1235
  %v1238 = vpack.c.bf16 %v1236, %v1236
  %v1239 = vld [vmem:[%s4] sm:$0xf]
  %v1240 = vld [vmem:[%s4 + $0x8] sm:$0xf]
  %v1241 = vld [vmem:[%s4 + $0x10] sm:$0xf]
  %v1242 = vld [vmem:[%s4 + $0x18] sm:$0xf]
  %v1243 = vld [vmem:[%s5 + $0x12] sm:$0x1]
  %v1244 = vperm.slane %v1243, 0
  %v1247 = vunpack.c.l.b16 %v1237
  %v1248 = vunpack.c.l.b16 %v1238
  %v1249 = vrot.slane %v1248, 7
  %vm1250 = vcmask 1041409
  %v1251 = vsel %vm1250, %v1249, %v1247
  %v1252 = vpack.c.b16 %v1251, %v1251
  %v1257 = vunpack.c.l.b16 %v1239
  %v1258 = vunpack.c.l.b16 %v1240
  %v1259 = vunpack.c.l.b16 %v1241
  %v1260 = vunpack.c.l.b16 %v1242
  %v1261 = vpack.c.b16 %v1258, %v1257
  %v1262 = vpack.c.b16 %v1260, %v1259
  %v1266 = vsel %vm28, %v1252, 0
  %1268 = vmatpush.bf16.msra.mxu0 0
  %1269 = vmatpush.bf16.msra.mxu0 0
  %1270 = vmatpush.bf16.msra.mxu0 0
  %1271 = vmatpush.bf16.msra.mxu0 0
  %1272 = vmatpush.bf16.msra.mxu0 0
  %1273 = vmatpush.bf16.msra.mxu0 0
  %1274 = vmatpush.bf16.msra.mxu0 %v1262
  %1275 = vmatpush.bf16.msra.mxu0 %v1261
  %1276 = vmatmul.bf16.gmra.mxu0 %v1266
  %v1277 = vpop.f32.mrf.mxu0
  %v1278 = vadd.f32 %v1244, %v1277
  %v1279 = vpop.f32.mrf.mxu0
  %1280 = vdwg.mxu0
  %v1281 = vtanh.pop %v1278
  %v1282 = vpack.c.bf16 %v1281, %v1281
  %v1283 = vld [vmem:[%s4] sm:$0xff]
  %v1284 = vld [vmem:[%s4 + $0x8] sm:$0xff]
  %v1285 = vld [vmem:[%s4 + $0x10] sm:$0xff]
  %v1286 = vld [vmem:[%s4 + $0x18] sm:$0xff]
  %v1287 = vld [vmem:[%s5 + $0x13] sm:$0x1]
  %v1288 = vperm.slane %v1287, 0
  %v1293 = vunpack.c.l.b16 %v1283
  %v1294 = vunpack.c.h.b16 %v1283
  %v1295 = vunpack.c.l.b16 %v1284
  %v1296 = vunpack.c.h.b16 %v1284
  %v1297 = vunpack.c.l.b16 %v1285
  %v1298 = vunpack.c.h.b16 %v1285
  %v1299 = vunpack.c.l.b16 %v1286
  %v1300 = vunpack.c.h.b16 %v1286
  %v1301 = vpack.c.b16 %v1295, %v1293
  %v1302 = vpack.c.b16 %v1296, %v1294
  %v1303 = vpack.c.b16 %v1299, %v1297
  %v1304 = vpack.c.b16 %v1300, %v1298
  %1305 = vrot.lane.b32.xlu0 %v1301, 96
  %v1306 = vpop.permute.xlu0 %1305
  %1307 = vrot.lane.b32.xlu0 %v1302, 96
  %v1308 = vpop.permute.xlu0 %1307
  %1309 = vrot.lane.b32.xlu0 %v1303, 96
  %v1310 = vpop.permute.xlu0 %1309
  %1311 = vrot.lane.b32.xlu0 %v1304, 96
  %v1312 = vpop.permute.xlu0 %1311
  %vm1313 = vcmask 785408
  %v1314 = vsel %vm1313, %v1306, %v1308
  %v1315 = vsel %vm1313, %v1310, %v1312
  %v1319 = vsel %vm28, %v1282, 0
  %1321 = vmatpush.bf16.msra.mxu0 0
  %1322 = vmatpush.bf16.msra.mxu0 0
  %1323 = vmatpush.bf16.msra.mxu0 0
  %1324 = vmatpush.bf16.msra.mxu0 0
  %1325 = vmatpush.bf16.msra.mxu0 0
  %1326 = vmatpush.bf16.msra.mxu0 0
  %1327 = vmatpush.bf16.msra.mxu0 %v1315
  %1328 = vmatpush.bf16.msra.mxu0 %v1314
  %1329 = vmatmul.bf16.gmra.mxu0 %v1319
  %v1330 = vpop.f32.mrf.mxu0
  %v1331 = vadd.f32 %v1288, %v1330
  %v1332 = vpop.f32.mrf.mxu0
  %1333 = vdwg.mxu0
  %1334 = vst [vmem:[%s6] sm:$0x3] %v1331
  // Predicated region
  $region26: #{model_forward.1} parent=0 // pred_check
    _
  $region27: #{model_forward.1} parent=0 // pred_check_branch
    %1336 = sbr.rel (0) target = $region29
  $region28: #{model_forward.1} parent=0 // pred_region
    _
  $region29: #{model_forward.1} parent=0 // pred_fallthru
    _
  // Predicated region
  $region30: #{model_forward.1} parent=0 // pred_check
    _
  $region31: #{model_forward.1} parent=0 // pred_check_branch
    %1338 = sbr.rel (0) target = $region33
  $region32: #{model_forward.1} parent=0 // pred_region
    _
  $region33: #{model_forward.1} parent=0 // pred_fallthru
    _

</llo_original>
